<compile_context>
chip_gen: v7x
topology: tpu7x:2x2x1
jax: 0.10.0
libtpu: 0.0.40
codegen_flags: <defaults>
</compile_context>

<pallas_src>
import jax
import jax.numpy as jnp
from jax import lax
from jax.experimental import pallas as pl
from jax.experimental.pallas import tpu as pltpu


def gru_linear_kernel(x_ref, h0_ref, wih_ref, whh_ref, bias_ref, wlin_ref,
                      out_ref, hN_ref):
    """Single-invocation fused GRU (gate order r,z,n) + output Linear.

    x_ref:    (B, T, I)  batch-first inputs
    h0_ref:   (1, B, H)  initial hidden state (num_layers = 1)
    wih_ref:  (I, 3H)    fused input weights  [W_ir | W_iz | W_in]^T
    whh_ref:  (H, 3H)    fused hidden weights [W_hr | W_hz | W_hn]^T
    bias_ref: (3, 3H)    row0 = b_ih + [b_hr | b_hz | 0]   (added to input proj)
                         row1 = [0 | 0 | b_hn]             (added to hidden proj)
                         row2 = b_lin zero-padded to 3H
    wlin_ref: (H, O)
    out_ref:  (B, T, O),  hN_ref: (1, B, H)
    """
    B, T, I = x_ref.shape
    H = h0_ref.shape[-1]
    O = out_ref.shape[-1]
    H3 = whh_ref.shape[-1]

    # ---- prologue: ONE fused input projection for all timesteps & gates.
    x2d = x_ref[...].reshape(B * T, I)                          # rows in (b, t) order
    gx = (jnp.dot(x2d, wih_ref[...], preferred_element_type=jnp.float32)
          + bias_ref[0:1, :]).reshape(B, T, H3)

    # hoisted loop invariants (weights + n-gate hidden-bias broadcast)
    whh = whh_ref[...]
    b_hn3 = jnp.broadcast_to(bias_ref[1:2, :], (B, H3))         # [0 | 0 | b_hn]

    # ---- recurrence: fully unrolled (T static & small); one fused matmul per
    # step; h_t stays in vregs (no per-step VMEM stores).
    h = h0_ref[0]                                               # (B, H)
    hs = []
    for t in range(T):
        gh = jnp.dot(h, whh, preferred_element_type=jnp.float32) + b_hn3
        gx_t = gx[:, t, :]
        g = gx_t + gh                                           # fused add before slicing
        r = jax.nn.sigmoid(g[:, 0:H])
        z = jax.nn.sigmoid(g[:, H:2 * H])
        n = jnp.tanh(gx_t[:, 2 * H:] + r * gh[:, 2 * H:])
        h = (1.0 - z) * n + z * h
        hs.append(h)

    hN_ref[0] = h                                               # final state, written once

    # ---- epilogue: stack the register-resident h_t once (major-axis concat),
    # run a single batched Linear over all timesteps, write the output.
    hseq = jnp.stack(hs, axis=0).reshape(T * B, H)              # rows in (t, b) order
    y = (jnp.dot(hseq, wlin_ref[...], preferred_element_type=jnp.float32)
         + bias_ref[2:3, :O]).reshape(T, B, O)
    for b in range(B):
        out_ref[b] = y[:, b, :]


def prepare_params(w_ih, w_hh, b_ih, b_hh, w_lin, b_lin):
    """One-time parameter preparation (fusion / transpose / bias folding).

    Call once per model, NOT per forward call — keeps the per-call path free
    of tiny XLA slice/transpose ops.
    """
    H = w_hh.shape[1]
    O = w_lin.shape[0]
    H3 = 3 * H
    w_ih = jnp.asarray(w_ih, jnp.float32)
    w_hh = jnp.asarray(w_hh, jnp.float32)
    b_ih = jnp.asarray(b_ih, jnp.float32)
    b_hh = jnp.asarray(b_hh, jnp.float32)
    w_lin = jnp.asarray(w_lin, jnp.float32)
    b_lin = jnp.asarray(b_lin, jnp.float32)

    wih_f = w_ih.T                                              # (I, 3H) — PyTorch packs [r; z; n] on dim 0
    whh_f = w_hh.T                                              # (H, 3H)
    # r/z gates: fold b_ih + b_hh; n gate keeps b_hn on the hidden side
    # (PyTorch: n = tanh(W_in x + b_in + r * (W_hn h + b_hn))).
    b_gx = jnp.concatenate([b_ih[:2 * H] + b_hh[:2 * H], b_ih[2 * H:]])
    b_gh = jnp.concatenate([jnp.zeros((2 * H,), jnp.float32), b_hh[2 * H:]])
    b_out = jnp.zeros((H3,), jnp.float32).at[:O].set(b_lin)
    bias_stack = jnp.stack([b_gx, b_gh, b_out], axis=0)         # (3, 3H)
    wlin_t = w_lin.T                                            # (H, O)
    return wih_f, whh_f, bias_stack, wlin_t


@jax.jit
def rnn_model_forward(inputs, state, wih_f, whh_f, bias_stack, wlin_t):
    """Equivalent of RNNModel.forward (single-layer nn.GRU + nn.Linear).

    inputs: (B, T, I), state: (1, B, H)  ->  (outputs (B, T, O), state (1, B, H))
    """
    B, T, _ = inputs.shape
    H = state.shape[-1]
    O = wlin_t.shape[-1]

    vmem = pl.BlockSpec(memory_space=pltpu.MemorySpace.VMEM)
    outputs, state_out = pl.pallas_call(
        gru_linear_kernel,
        out_shape=(jax.ShapeDtypeStruct((B, T, O), jnp.float32),
                   jax.ShapeDtypeStruct((1, B, H), jnp.float32)),
        in_specs=[vmem] * 6,
        out_specs=(vmem, vmem),
    )(inputs.astype(jnp.float32), state.astype(jnp.float32),
      wih_f, whh_f, bias_stack, wlin_t)

    return outputs, state_out


def reference_forward(inputs, state, w_ih, w_hh, b_ih, b_hh, w_lin, b_lin):
    """Pure-JAX reference implementing the same PyTorch GRU + Linear math."""
    H = w_hh.shape[1]
    x_tbi = jnp.transpose(inputs, (1, 0, 2))
    h0 = state[0]

    def step(h, x_t):
        gx = x_t @ w_ih.T + b_ih
        gh = h @ w_hh.T + b_hh
        r = jax.nn.sigmoid(gx[:, 0:H] + gh[:, 0:H])
        z = jax.nn.sigmoid(gx[:, H:2 * H] + gh[:, H:2 * H])
        n = jnp.tanh(gx[:, 2 * H:3 * H] + r * gh[:, 2 * H:3 * H])
        h_new = (1.0 - z) * n + z * h
        return h_new, h_new

    hN, hs = lax.scan(step, h0, x_tbi)
    out = hs @ w_lin.T + b_lin                                  # (T, B, O)
    return jnp.transpose(out, (1, 0, 2)), hN[None]


if __name__ == "__main__":
    B, T, I, H, O = 2, 8, 4, 32, 4   # batch, num_steps, input_size, hidden, num_outputs

    key = jax.random.PRNGKey(0)
    k_x, k_wih, k_whh, k_wlin = jax.random.split(key, 4)

    # deterministic parameter init matching the module: weights ~ N(0, 50), biases = 0
    w_ih = 50.0 * jax.random.normal(k_wih, (3 * H, I), dtype=jnp.float32)
    w_hh = 50.0 * jax.random.normal(k_whh, (3 * H, H), dtype=jnp.float32)
    b_ih = jnp.zeros((3 * H,), dtype=jnp.float32)
    b_hh = jnp.zeros((3 * H,), dtype=jnp.float32)
    w_lin = 50.0 * jax.random.normal(k_wlin, (O, H), dtype=jnp.float32)
    b_lin = jnp.zeros((O,), dtype=jnp.float32)

    inputs = jax.random.normal(k_x, (B, T, I), dtype=jnp.float32)
    state = jnp.zeros((1, B, H), dtype=jnp.float32)             # begin_state (GRU, num_layers=1)

    # one-time weight prep (outside the per-call path)
    wih_f, whh_f, bias_stack, wlin_t = prepare_params(w_ih, w_hh, b_ih, b_hh,
                                                      w_lin, b_lin)

    outputs, state_out = rnn_model_forward(inputs, state, wih_f, whh_f,
                                           bias_stack, wlin_t)
    outputs = jax.block_until_ready(outputs)
    state_out = jax.block_until_ready(state_out)

    ref_out, ref_state = reference_forward(inputs, state, w_ih, w_hh, b_ih, b_hh,
                                           w_lin, b_lin)
    scale = float(jnp.max(jnp.abs(ref_out))) + 1e-6
    assert float(jnp.max(jnp.abs(outputs - ref_out))) < 1e-2 * scale + 1e-3
    assert float(jnp.max(jnp.abs(state_out - ref_state))) < 1e-2

    assert outputs.shape == (B, T, O) and state_out.shape == (1, B, H)
    print("KERNEL_OK")
</pallas_src>

<mosaic_0001>
module attributes {stable_mosaic.version = 11 : i64} {
  func.func @gru_linear_kernel(%arg0: memref<2x8x4xf32, #tpu.memory_space<vmem>>, %arg1: memref<1x2x32xf32, #tpu.memory_space<vmem>>, %arg2: memref<4x96xf32, #tpu.memory_space<vmem>>, %arg3: memref<32x96xf32, #tpu.memory_space<vmem>>, %arg4: memref<3x96xf32, #tpu.memory_space<vmem>>, %arg5: memref<32x4xf32, #tpu.memory_space<vmem>>, %arg6: memref<2x8x4xf32, #tpu.memory_space<vmem>>, %arg7: memref<1x2x32xf32, #tpu.memory_space<vmem>>) attributes {dimension_semantics = [], scalar_prefetch = 0 : i64, scratch_operands = 0 : i64, tpu.core_type = #tpu.core_type<tc>} {
    %c0 = arith.constant 0 : index
    %c0_0 = arith.constant 0 : index
    %c0_1 = arith.constant 0 : index
    %0 = vector.load %arg0[%c0, %c0_0, %c0_1] : memref<2x8x4xf32, #tpu.memory_space<vmem>>, vector<2x8x4xf32>
    %1 = vector.shape_cast %0 : vector<2x8x4xf32> to vector<16x4xf32>
    %c0_2 = arith.constant 0 : index
    %c0_3 = arith.constant 0 : index
    %2 = vector.load %arg2[%c0_2, %c0_3] : memref<4x96xf32, #tpu.memory_space<vmem>>, vector<4x96xf32>
    %cst = arith.constant dense<0.000000e+00> : vector<16x96xf32>
    %3 = tpu.matmul %1, %2, %cst {dimension_numbers = #tpu.dot_dimension_numbers<[1], [0], [0], [1], [0, 0, 1, 1], [], []>} : vector<16x4xf32>, vector<4x96xf32>, vector<16x96xf32> -> vector<16x96xf32>
    %c0_4 = arith.constant 0 : index
    %c0_5 = arith.constant 0 : index
    %4 = vector.load %arg4[%c0_4, %c0_5] : memref<3x96xf32, #tpu.memory_space<vmem>>, vector<1x96xf32>
    %5 = vector.broadcast %4 : vector<1x96xf32> to vector<16x96xf32>
    %6 = arith.addf %3, %5 : vector<16x96xf32>
    %7 = vector.shape_cast %6 : vector<16x96xf32> to vector<2x8x96xf32>
    %c0_6 = arith.constant 0 : index
    %c0_7 = arith.constant 0 : index
    %8 = vector.load %arg3[%c0_6, %c0_7] : memref<32x96xf32, #tpu.memory_space<vmem>>, vector<32x96xf32>
    %c1 = arith.constant 1 : index
    %c0_8 = arith.constant 0 : index
    %9 = vector.load %arg4[%c1, %c0_8] : memref<3x96xf32, #tpu.memory_space<vmem>>, vector<1x96xf32>
    %10 = vector.shape_cast %9 : vector<1x96xf32> to vector<1x96xf32>
    %11 = vector.broadcast %10 : vector<1x96xf32> to vector<2x96xf32>
    %c0_9 = arith.constant 0 : index
    %c0_10 = arith.constant 0 : index
    %c0_11 = arith.constant 0 : index
    %12 = vector.load %arg1[%c0_9, %c0_10, %c0_11] : memref<1x2x32xf32, #tpu.memory_space<vmem>>, vector<1x2x32xf32>
    %13 = vector.shape_cast %12 : vector<1x2x32xf32> to vector<2x32xf32>
    %cst_12 = arith.constant dense<0.000000e+00> : vector<2x96xf32>
    %14 = tpu.matmul %13, %8, %cst_12 {dimension_numbers = #tpu.dot_dimension_numbers<[1], [0], [0], [1], [0, 0, 1, 1], [], []>} : vector<2x32xf32>, vector<32x96xf32>, vector<2x96xf32> -> vector<2x96xf32>
    %15 = arith.addf %14, %11 : vector<2x96xf32>
    %16 = vector.extract_strided_slice %7 {offsets = [0, 0, 0], sizes = [2, 1, 96], strides = [1, 1, 1]} : vector<2x8x96xf32> to vector<2x1x96xf32>
    %17 = vector.shape_cast %16 : vector<2x1x96xf32> to vector<2x96xf32>
    %18 = arith.addf %17, %15 : vector<2x96xf32>
    %19 = vector.extract_strided_slice %18 {offsets = [0, 0], sizes = [2, 32], strides = [1, 1]} : vector<2x96xf32> to vector<2x32xf32>
    %20 = arith.negf %19 : vector<2x32xf32>
    %21 = math.exp %20 : vector<2x32xf32>
    %cst_13 = arith.constant 1.000000e+00 : f32
    %22 = vector.broadcast %cst_13 : f32 to vector<2x32xf32>
    %23 = arith.addf %22, %21 : vector<2x32xf32>
    %24 = arith.divf %22, %23 : vector<2x32xf32>
    %25 = vector.extract_strided_slice %18 {offsets = [0, 32], sizes = [2, 32], strides = [1, 1]} : vector<2x96xf32> to vector<2x32xf32>
    %26 = arith.negf %25 : vector<2x32xf32>
    %27 = math.exp %26 : vector<2x32xf32>
    %cst_14 = arith.constant 1.000000e+00 : f32
    %28 = vector.broadcast %cst_14 : f32 to vector<2x32xf32>
    %29 = arith.addf %28, %27 : vector<2x32xf32>
    %30 = arith.divf %28, %29 : vector<2x32xf32>
    %31 = vector.extract_strided_slice %17 {offsets = [0, 64], sizes = [2, 32], strides = [1, 1]} : vector<2x96xf32> to vector<2x32xf32>
    %32 = vector.extract_strided_slice %15 {offsets = [0, 64], sizes = [2, 32], strides = [1, 1]} : vector<2x96xf32> to vector<2x32xf32>
    %33 = arith.mulf %24, %32 : vector<2x32xf32>
    %34 = arith.addf %31, %33 : vector<2x32xf32>
    %35 = math.tanh %34 : vector<2x32xf32>
    %cst_15 = arith.constant 1.000000e+00 : f32
    %36 = vector.broadcast %cst_15 : f32 to vector<2x32xf32>
    %37 = arith.subf %36, %30 : vector<2x32xf32>
    %38 = arith.mulf %37, %35 : vector<2x32xf32>
    %39 = arith.mulf %30, %13 : vector<2x32xf32>
    %40 = arith.addf %38, %39 : vector<2x32xf32>
    %cst_16 = arith.constant dense<0.000000e+00> : vector<2x96xf32>
    %41 = tpu.matmul %40, %8, %cst_16 {dimension_numbers = #tpu.dot_dimension_numbers<[1], [0], [0], [1], [0, 0, 1, 1], [], []>} : vector<2x32xf32>, vector<32x96xf32>, vector<2x96xf32> -> vector<2x96xf32>
    %42 = arith.addf %41, %11 : vector<2x96xf32>
    %43 = vector.extract_strided_slice %7 {offsets = [0, 1, 0], sizes = [2, 1, 96], strides = [1, 1, 1]} : vector<2x8x96xf32> to vector<2x1x96xf32>
    %44 = vector.shape_cast %43 : vector<2x1x96xf32> to vector<2x96xf32>
    %45 = arith.addf %44, %42 : vector<2x96xf32>
    %46 = vector.extract_strided_slice %45 {offsets = [0, 0], sizes = [2, 32], strides = [1, 1]} : vector<2x96xf32> to vector<2x32xf32>
    %47 = arith.negf %46 : vector<2x32xf32>
    %48 = math.exp %47 : vector<2x32xf32>
    %cst_17 = arith.constant 1.000000e+00 : f32
    %49 = vector.broadcast %cst_17 : f32 to vector<2x32xf32>
    %50 = arith.addf %49, %48 : vector<2x32xf32>
    %51 = arith.divf %49, %50 : vector<2x32xf32>
    %52 = vector.extract_strided_slice %45 {offsets = [0, 32], sizes = [2, 32], strides = [1, 1]} : vector<2x96xf32> to vector<2x32xf32>
    %53 = arith.negf %52 : vector<2x32xf32>
    %54 = math.exp %53 : vector<2x32xf32>
    %cst_18 = arith.constant 1.000000e+00 : f32
    %55 = vector.broadcast %cst_18 : f32 to vector<2x32xf32>
    %56 = arith.addf %55, %54 : vector<2x32xf32>
    %57 = arith.divf %55, %56 : vector<2x32xf32>
    %58 = vector.extract_strided_slice %44 {offsets = [0, 64], sizes = [2, 32], strides = [1, 1]} : vector<2x96xf32> to vector<2x32xf32>
    %59 = vector.extract_strided_slice %42 {offsets = [0, 64], sizes = [2, 32], strides = [1, 1]} : vector<2x96xf32> to vector<2x32xf32>
    %60 = arith.mulf %51, %59 : vector<2x32xf32>
    %61 = arith.addf %58, %60 : vector<2x32xf32>
    %62 = math.tanh %61 : vector<2x32xf32>
    %cst_19 = arith.constant 1.000000e+00 : f32
    %63 = vector.broadcast %cst_19 : f32 to vector<2x32xf32>
    %64 = arith.subf %63, %57 : vector<2x32xf32>
    %65 = arith.mulf %64, %62 : vector<2x32xf32>
    %66 = arith.mulf %57, %40 : vector<2x32xf32>
    %67 = arith.addf %65, %66 : vector<2x32xf32>
    %cst_20 = arith.constant dense<0.000000e+00> : vector<2x96xf32>
    %68 = tpu.matmul %67, %8, %cst_20 {dimension_numbers = #tpu.dot_dimension_numbers<[1], [0], [0], [1], [0, 0, 1, 1], [], []>} : vector<2x32xf32>, vector<32x96xf32>, vector<2x96xf32> -> vector<2x96xf32>
    %69 = arith.addf %68, %11 : vector<2x96xf32>
    %70 = vector.extract_strided_slice %7 {offsets = [0, 2, 0], sizes = [2, 1, 96], strides = [1, 1, 1]} : vector<2x8x96xf32> to vector<2x1x96xf32>
    %71 = vector.shape_cast %70 : vector<2x1x96xf32> to vector<2x96xf32>
    %72 = arith.addf %71, %69 : vector<2x96xf32>
    %73 = vector.extract_strided_slice %72 {offsets = [0, 0], sizes = [2, 32], strides = [1, 1]} : vector<2x96xf32> to vector<2x32xf32>
    %74 = arith.negf %73 : vector<2x32xf32>
    %75 = math.exp %74 : vector<2x32xf32>
    %cst_21 = arith.constant 1.000000e+00 : f32
    %76 = vector.broadcast %cst_21 : f32 to vector<2x32xf32>
    %77 = arith.addf %76, %75 : vector<2x32xf32>
    %78 = arith.divf %76, %77 : vector<2x32xf32>
    %79 = vector.extract_strided_slice %72 {offsets = [0, 32], sizes = [2, 32], strides = [1, 1]} : vector<2x96xf32> to vector<2x32xf32>
    %80 = arith.negf %79 : vector<2x32xf32>
    %81 = math.exp %80 : vector<2x32xf32>
    %cst_22 = arith.constant 1.000000e+00 : f32
    %82 = vector.broadcast %cst_22 : f32 to vector<2x32xf32>
    %83 = arith.addf %82, %81 : vector<2x32xf32>
    %84 = arith.divf %82, %83 : vector<2x32xf32>
    %85 = vector.extract_strided_slice %71 {offsets = [0, 64], sizes = [2, 32], strides = [1, 1]} : vector<2x96xf32> to vector<2x32xf32>
    %86 = vector.extract_strided_slice %69 {offsets = [0, 64], sizes = [2, 32], strides = [1, 1]} : vector<2x96xf32> to vector<2x32xf32>
    %87 = arith.mulf %78, %86 : vector<2x32xf32>
    %88 = arith.addf %85, %87 : vector<2x32xf32>
    %89 = math.tanh %88 : vector<2x32xf32>
    %cst_23 = arith.constant 1.000000e+00 : f32
    %90 = vector.broadcast %cst_23 : f32 to vector<2x32xf32>
    %91 = arith.subf %90, %84 : vector<2x32xf32>
    %92 = arith.mulf %91, %89 : vector<2x32xf32>
    %93 = arith.mulf %84, %67 : vector<2x32xf32>
    %94 = arith.addf %92, %93 : vector<2x32xf32>
    %cst_24 = arith.constant dense<0.000000e+00> : vector<2x96xf32>
    %95 = tpu.matmul %94, %8, %cst_24 {dimension_numbers = #tpu.dot_dimension_numbers<[1], [0], [0], [1], [0, 0, 1, 1], [], []>} : vector<2x32xf32>, vector<32x96xf32>, vector<2x96xf32> -> vector<2x96xf32>
    %96 = arith.addf %95, %11 : vector<2x96xf32>
    %97 = vector.extract_strided_slice %7 {offsets = [0, 3, 0], sizes = [2, 1, 96], strides = [1, 1, 1]} : vector<2x8x96xf32> to vector<2x1x96xf32>
    %98 = vector.shape_cast %97 : vector<2x1x96xf32> to vector<2x96xf32>
    %99 = arith.addf %98, %96 : vector<2x96xf32>
    %100 = vector.extract_strided_slice %99 {offsets = [0, 0], sizes = [2, 32], strides = [1, 1]} : vector<2x96xf32> to vector<2x32xf32>
    %101 = arith.negf %100 : vector<2x32xf32>
    %102 = math.exp %101 : vector<2x32xf32>
    %cst_25 = arith.constant 1.000000e+00 : f32
    %103 = vector.broadcast %cst_25 : f32 to vector<2x32xf32>
    %104 = arith.addf %103, %102 : vector<2x32xf32>
    %105 = arith.divf %103, %104 : vector<2x32xf32>
    %106 = vector.extract_strided_slice %99 {offsets = [0, 32], sizes = [2, 32], strides = [1, 1]} : vector<2x96xf32> to vector<2x32xf32>
    %107 = arith.negf %106 : vector<2x32xf32>
    %108 = math.exp %107 : vector<2x32xf32>
    %cst_26 = arith.constant 1.000000e+00 : f32
    %109 = vector.broadcast %cst_26 : f32 to vector<2x32xf32>
    %110 = arith.addf %109, %108 : vector<2x32xf32>
    %111 = arith.divf %109, %110 : vector<2x32xf32>
    %112 = vector.extract_strided_slice %98 {offsets = [0, 64], sizes = [2, 32], strides = [1, 1]} : vector<2x96xf32> to vector<2x32xf32>
    %113 = vector.extract_strided_slice %96 {offsets = [0, 64], sizes = [2, 32], strides = [1, 1]} : vector<2x96xf32> to vector<2x32xf32>
    %114 = arith.mulf %105, %113 : vector<2x32xf32>
    %115 = arith.addf %112, %114 : vector<2x32xf32>
    %116 = math.tanh %115 : vector<2x32xf32>
    %cst_27 = arith.constant 1.000000e+00 : f32
    %117 = vector.broadcast %cst_27 : f32 to vector<2x32xf32>
    %118 = arith.subf %117, %111 : vector<2x32xf32>
    %119 = arith.mulf %118, %116 : vector<2x32xf32>
    %120 = arith.mulf %111, %94 : vector<2x32xf32>
    %121 = arith.addf %119, %120 : vector<2x32xf32>
    %cst_28 = arith.constant dense<0.000000e+00> : vector<2x96xf32>
    %122 = tpu.matmul %121, %8, %cst_28 {dimension_numbers = #tpu.dot_dimension_numbers<[1], [0], [0], [1], [0, 0, 1, 1], [], []>} : vector<2x32xf32>, vector<32x96xf32>, vector<2x96xf32> -> vector<2x96xf32>
    %123 = arith.addf %122, %11 : vector<2x96xf32>
    %124 = vector.extract_strided_slice %7 {offsets = [0, 4, 0], sizes = [2, 1, 96], strides = [1, 1, 1]} : vector<2x8x96xf32> to vector<2x1x96xf32>
    %125 = vector.shape_cast %124 : vector<2x1x96xf32> to vector<2x96xf32>
    %126 = arith.addf %125, %123 : vector<2x96xf32>
    %127 = vector.extract_strided_slice %126 {offsets = [0, 0], sizes = [2, 32], strides = [1, 1]} : vector<2x96xf32> to vector<2x32xf32>
    %128 = arith.negf %127 : vector<2x32xf32>
    %129 = math.exp %128 : vector<2x32xf32>
    %cst_29 = arith.constant 1.000000e+00 : f32
    %130 = vector.broadcast %cst_29 : f32 to vector<2x32xf32>
    %131 = arith.addf %130, %129 : vector<2x32xf32>
    %132 = arith.divf %130, %131 : vector<2x32xf32>
    %133 = vector.extract_strided_slice %126 {offsets = [0, 32], sizes = [2, 32], strides = [1, 1]} : vector<2x96xf32> to vector<2x32xf32>
    %134 = arith.negf %133 : vector<2x32xf32>
    %135 = math.exp %134 : vector<2x32xf32>
    %cst_30 = arith.constant 1.000000e+00 : f32
    %136 = vector.broadcast %cst_30 : f32 to vector<2x32xf32>
    %137 = arith.addf %136, %135 : vector<2x32xf32>
    %138 = arith.divf %136, %137 : vector<2x32xf32>
    %139 = vector.extract_strided_slice %125 {offsets = [0, 64], sizes = [2, 32], strides = [1, 1]} : vector<2x96xf32> to vector<2x32xf32>
    %140 = vector.extract_strided_slice %123 {offsets = [0, 64], sizes = [2, 32], strides = [1, 1]} : vector<2x96xf32> to vector<2x32xf32>
    %141 = arith.mulf %132, %140 : vector<2x32xf32>
    %142 = arith.addf %139, %141 : vector<2x32xf32>
    %143 = math.tanh %142 : vector<2x32xf32>
    %cst_31 = arith.constant 1.000000e+00 : f32
    %144 = vector.broadcast %cst_31 : f32 to vector<2x32xf32>
    %145 = arith.subf %144, %138 : vector<2x32xf32>
    %146 = arith.mulf %145, %143 : vector<2x32xf32>
    %147 = arith.mulf %138, %121 : vector<2x32xf32>
    %148 = arith.addf %146, %147 : vector<2x32xf32>
    %cst_32 = arith.constant dense<0.000000e+00> : vector<2x96xf32>
    %149 = tpu.matmul %148, %8, %cst_32 {dimension_numbers = #tpu.dot_dimension_numbers<[1], [0], [0], [1], [0, 0, 1, 1], [], []>} : vector<2x32xf32>, vector<32x96xf32>, vector<2x96xf32> -> vector<2x96xf32>
    %150 = arith.addf %149, %11 : vector<2x96xf32>
    %151 = vector.extract_strided_slice %7 {offsets = [0, 5, 0], sizes = [2, 1, 96], strides = [1, 1, 1]} : vector<2x8x96xf32> to vector<2x1x96xf32>
    %152 = vector.shape_cast %151 : vector<2x1x96xf32> to vector<2x96xf32>
    %153 = arith.addf %152, %150 : vector<2x96xf32>
    %154 = vector.extract_strided_slice %153 {offsets = [0, 0], sizes = [2, 32], strides = [1, 1]} : vector<2x96xf32> to vector<2x32xf32>
    %155 = arith.negf %154 : vector<2x32xf32>
    %156 = math.exp %155 : vector<2x32xf32>
    %cst_33 = arith.constant 1.000000e+00 : f32
    %157 = vector.broadcast %cst_33 : f32 to vector<2x32xf32>
    %158 = arith.addf %157, %156 : vector<2x32xf32>
    %159 = arith.divf %157, %158 : vector<2x32xf32>
    %160 = vector.extract_strided_slice %153 {offsets = [0, 32], sizes = [2, 32], strides = [1, 1]} : vector<2x96xf32> to vector<2x32xf32>
    %161 = arith.negf %160 : vector<2x32xf32>
    %162 = math.exp %161 : vector<2x32xf32>
    %cst_34 = arith.constant 1.000000e+00 : f32
    %163 = vector.broadcast %cst_34 : f32 to vector<2x32xf32>
    %164 = arith.addf %163, %162 : vector<2x32xf32>
    %165 = arith.divf %163, %164 : vector<2x32xf32>
    %166 = vector.extract_strided_slice %152 {offsets = [0, 64], sizes = [2, 32], strides = [1, 1]} : vector<2x96xf32> to vector<2x32xf32>
    %167 = vector.extract_strided_slice %150 {offsets = [0, 64], sizes = [2, 32], strides = [1, 1]} : vector<2x96xf32> to vector<2x32xf32>
    %168 = arith.mulf %159, %167 : vector<2x32xf32>
    %169 = arith.addf %166, %168 : vector<2x32xf32>
    %170 = math.tanh %169 : vector<2x32xf32>
    %cst_35 = arith.constant 1.000000e+00 : f32
    %171 = vector.broadcast %cst_35 : f32 to vector<2x32xf32>
    %172 = arith.subf %171, %165 : vector<2x32xf32>
    %173 = arith.mulf %172, %170 : vector<2x32xf32>
    %174 = arith.mulf %165, %148 : vector<2x32xf32>
    %175 = arith.addf %173, %174 : vector<2x32xf32>
    %cst_36 = arith.constant dense<0.000000e+00> : vector<2x96xf32>
    %176 = tpu.matmul %175, %8, %cst_36 {dimension_numbers = #tpu.dot_dimension_numbers<[1], [0], [0], [1], [0, 0, 1, 1], [], []>} : vector<2x32xf32>, vector<32x96xf32>, vector<2x96xf32> -> vector<2x96xf32>
    %177 = arith.addf %176, %11 : vector<2x96xf32>
    %178 = vector.extract_strided_slice %7 {offsets = [0, 6, 0], sizes = [2, 1, 96], strides = [1, 1, 1]} : vector<2x8x96xf32> to vector<2x1x96xf32>
    %179 = vector.shape_cast %178 : vector<2x1x96xf32> to vector<2x96xf32>
    %180 = arith.addf %179, %177 : vector<2x96xf32>
    %181 = vector.extract_strided_slice %180 {offsets = [0, 0], sizes = [2, 32], strides = [1, 1]} : vector<2x96xf32> to vector<2x32xf32>
    %182 = arith.negf %181 : vector<2x32xf32>
    %183 = math.exp %182 : vector<2x32xf32>
    %cst_37 = arith.constant 1.000000e+00 : f32
    %184 = vector.broadcast %cst_37 : f32 to vector<2x32xf32>
    %185 = arith.addf %184, %183 : vector<2x32xf32>
    %186 = arith.divf %184, %185 : vector<2x32xf32>
    %187 = vector.extract_strided_slice %180 {offsets = [0, 32], sizes = [2, 32], strides = [1, 1]} : vector<2x96xf32> to vector<2x32xf32>
    %188 = arith.negf %187 : vector<2x32xf32>
    %189 = math.exp %188 : vector<2x32xf32>
    %cst_38 = arith.constant 1.000000e+00 : f32
    %190 = vector.broadcast %cst_38 : f32 to vector<2x32xf32>
    %191 = arith.addf %190, %189 : vector<2x32xf32>
    %192 = arith.divf %190, %191 : vector<2x32xf32>
    %193 = vector.extract_strided_slice %179 {offsets = [0, 64], sizes = [2, 32], strides = [1, 1]} : vector<2x96xf32> to vector<2x32xf32>
    %194 = vector.extract_strided_slice %177 {offsets = [0, 64], sizes = [2, 32], strides = [1, 1]} : vector<2x96xf32> to vector<2x32xf32>
    %195 = arith.mulf %186, %194 : vector<2x32xf32>
    %196 = arith.addf %193, %195 : vector<2x32xf32>
    %197 = math.tanh %196 : vector<2x32xf32>
    %cst_39 = arith.constant 1.000000e+00 : f32
    %198 = vector.broadcast %cst_39 : f32 to vector<2x32xf32>
    %199 = arith.subf %198, %192 : vector<2x32xf32>
    %200 = arith.mulf %199, %197 : vector<2x32xf32>
    %201 = arith.mulf %192, %175 : vector<2x32xf32>
    %202 = arith.addf %200, %201 : vector<2x32xf32>
    %cst_40 = arith.constant dense<0.000000e+00> : vector<2x96xf32>
    %203 = tpu.matmul %202, %8, %cst_40 {dimension_numbers = #tpu.dot_dimension_numbers<[1], [0], [0], [1], [0, 0, 1, 1], [], []>} : vector<2x32xf32>, vector<32x96xf32>, vector<2x96xf32> -> vector<2x96xf32>
    %204 = arith.addf %203, %11 : vector<2x96xf32>
    %205 = vector.extract_strided_slice %7 {offsets = [0, 7, 0], sizes = [2, 1, 96], strides = [1, 1, 1]} : vector<2x8x96xf32> to vector<2x1x96xf32>
    %206 = vector.shape_cast %205 : vector<2x1x96xf32> to vector<2x96xf32>
    %207 = arith.addf %206, %204 : vector<2x96xf32>
    %208 = vector.extract_strided_slice %207 {offsets = [0, 0], sizes = [2, 32], strides = [1, 1]} : vector<2x96xf32> to vector<2x32xf32>
    %209 = arith.negf %208 : vector<2x32xf32>
    %210 = math.exp %209 : vector<2x32xf32>
    %cst_41 = arith.constant 1.000000e+00 : f32
    %211 = vector.broadcast %cst_41 : f32 to vector<2x32xf32>
    %212 = arith.addf %211, %210 : vector<2x32xf32>
    %213 = arith.divf %211, %212 : vector<2x32xf32>
    %214 = vector.extract_strided_slice %207 {offsets = [0, 32], sizes = [2, 32], strides = [1, 1]} : vector<2x96xf32> to vector<2x32xf32>
    %215 = arith.negf %214 : vector<2x32xf32>
    %216 = math.exp %215 : vector<2x32xf32>
    %cst_42 = arith.constant 1.000000e+00 : f32
    %217 = vector.broadcast %cst_42 : f32 to vector<2x32xf32>
    %218 = arith.addf %217, %216 : vector<2x32xf32>
    %219 = arith.divf %217, %218 : vector<2x32xf32>
    %220 = vector.extract_strided_slice %206 {offsets = [0, 64], sizes = [2, 32], strides = [1, 1]} : vector<2x96xf32> to vector<2x32xf32>
    %221 = vector.extract_strided_slice %204 {offsets = [0, 64], sizes = [2, 32], strides = [1, 1]} : vector<2x96xf32> to vector<2x32xf32>
    %222 = arith.mulf %213, %221 : vector<2x32xf32>
    %223 = arith.addf %220, %222 : vector<2x32xf32>
    %224 = math.tanh %223 : vector<2x32xf32>
    %cst_43 = arith.constant 1.000000e+00 : f32
    %225 = vector.broadcast %cst_43 : f32 to vector<2x32xf32>
    %226 = arith.subf %225, %219 : vector<2x32xf32>
    %227 = arith.mulf %226, %224 : vector<2x32xf32>
    %228 = arith.mulf %219, %202 : vector<2x32xf32>
    %229 = arith.addf %227, %228 : vector<2x32xf32>
    %c0_44 = arith.constant 0 : index
    %c0_45 = arith.constant 0 : index
    %c0_46 = arith.constant 0 : index
    %230 = vector.load %arg7[%c0_44, %c0_45, %c0_46] : memref<1x2x32xf32, #tpu.memory_space<vmem>>, vector<1x2x32xf32>
    %231 = vector.shape_cast %230 : vector<1x2x32xf32> to vector<2x32xf32>
    %232 = vector.shape_cast %229 : vector<2x32xf32> to vector<1x2x32xf32>
    tpu.vector_store %arg7[%c0_44, %c0_45, %c0_46], %232 {strides = array<i32>} : memref<1x2x32xf32, #tpu.memory_space<vmem>>, vector<1x2x32xf32>,
    %233 = vector.shape_cast %40 : vector<2x32xf32> to vector<1x2x32xf32>
    %234 = vector.shape_cast %67 : vector<2x32xf32> to vector<1x2x32xf32>
    %235 = vector.shape_cast %94 : vector<2x32xf32> to vector<1x2x32xf32>
    %236 = vector.shape_cast %121 : vector<2x32xf32> to vector<1x2x32xf32>
    %237 = vector.shape_cast %148 : vector<2x32xf32> to vector<1x2x32xf32>
    %238 = vector.shape_cast %175 : vector<2x32xf32> to vector<1x2x32xf32>
    %239 = vector.shape_cast %202 : vector<2x32xf32> to vector<1x2x32xf32>
    %240 = vector.shape_cast %229 : vector<2x32xf32> to vector<1x2x32xf32>
    %241 = tpu.concatenate %233, %234, %235, %236, %237, %238, %239, %240 in 0 : vector<1x2x32xf32>, vector<1x2x32xf32>, vector<1x2x32xf32>, vector<1x2x32xf32>, vector<1x2x32xf32>, vector<1x2x32xf32>, vector<1x2x32xf32>, vector<1x2x32xf32> -> vector<8x2x32xf32>
    %242 = vector.shape_cast %241 : vector<8x2x32xf32> to vector<16x32xf32>
    %c0_47 = arith.constant 0 : index
    %c0_48 = arith.constant 0 : index
    %243 = vector.load %arg5[%c0_47, %c0_48] : memref<32x4xf32, #tpu.memory_space<vmem>>, vector<32x4xf32>
    %cst_49 = arith.constant dense<0.000000e+00> : vector<16x4xf32>
    %244 = tpu.matmul %242, %243, %cst_49 {dimension_numbers = #tpu.dot_dimension_numbers<[1], [0], [0], [1], [0, 0, 1, 1], [], []>} : vector<16x32xf32>, vector<32x4xf32>, vector<16x4xf32> -> vector<16x4xf32>
    %c2 = arith.constant 2 : index
    %c0_50 = arith.constant 0 : index
    %245 = vector.load %arg4[%c2, %c0_50] : memref<3x96xf32, #tpu.memory_space<vmem>>, vector<1x4xf32>
    %246 = vector.broadcast %245 : vector<1x4xf32> to vector<16x4xf32>
    %247 = arith.addf %244, %246 : vector<16x4xf32>
    %248 = vector.shape_cast %247 : vector<16x4xf32> to vector<8x2x4xf32>
    %249 = vector.extract_strided_slice %248 {offsets = [0, 0, 0], sizes = [8, 1, 4], strides = [1, 1, 1]} : vector<8x2x4xf32> to vector<8x1x4xf32>
    %250 = vector.shape_cast %249 : vector<8x1x4xf32> to vector<8x4xf32>
    %c0_51 = arith.constant 0 : index
    %c0_52 = arith.constant 0 : index
    %c0_53 = arith.constant 0 : index
    %251 = vector.load %arg6[%c0_51, %c0_52, %c0_53] : memref<2x8x4xf32, #tpu.memory_space<vmem>>, vector<1x8x4xf32>
    %252 = vector.shape_cast %251 : vector<1x8x4xf32> to vector<8x4xf32>
    %253 = vector.shape_cast %250 : vector<8x4xf32> to vector<1x8x4xf32>
    tpu.vector_store %arg6[%c0_51, %c0_52, %c0_53], %253 {strides = array<i32>} : memref<2x8x4xf32, #tpu.memory_space<vmem>>, vector<1x8x4xf32>,
    %254 = vector.extract_strided_slice %248 {offsets = [0, 1, 0], sizes = [8, 1, 4], strides = [1, 1, 1]} : vector<8x2x4xf32> to vector<8x1x4xf32>
    %255 = vector.shape_cast %254 : vector<8x1x4xf32> to vector<8x4xf32>
    %c1_54 = arith.constant 1 : index
    %c0_55 = arith.constant 0 : index
    %c0_56 = arith.constant 0 : index
    %256 = vector.load %arg6[%c1_54, %c0_55, %c0_56] : memref<2x8x4xf32, #tpu.memory_space<vmem>>, vector<1x8x4xf32>
    %257 = vector.shape_cast %256 : vector<1x8x4xf32> to vector<8x4xf32>
    %258 = vector.shape_cast %255 : vector<8x4xf32> to vector<1x8x4xf32>
    tpu.vector_store %arg6[%c1_54, %c0_55, %c0_56], %258 {strides = array<i32>} : memref<2x8x4xf32, #tpu.memory_space<vmem>>, vector<1x8x4xf32>,
    return
  }
}

</mosaic_0001>

<llo_original>
// kernel: rnn_model_forward.1
$region0: #{rnn_model_forward.1}
  #allocation0 [shape = 'u32[]', space=smem, size = 0x4, offset = 0x4, fixed_abs, tag = 'smem constant byte address 0x4 - core index']
  #allocation1 [shape = 'u32[144,128]{1,0:T(1,128)}', space=vmem, size = 0x12000, scoped, tag = 'internal scratch']
  %s0 = inlined_call_operand.vmem [shape: f32[2,8,4], index: 0, kind: input, shape index: {}]
  %s1 = inlined_call_operand.vmem [shape: f32[1,2,32], index: 1, kind: input, shape index: {}]
  %s2 = inlined_call_operand.vmem [shape: f32[4,96], index: 2, kind: input, shape index: {}]
  %s3 = inlined_call_operand.vmem [shape: f32[32,96], index: 3, kind: input, shape index: {}]
  %s4 = inlined_call_operand.vmem [shape: f32[3,96], index: 4, kind: input, shape index: {}]
  %s5 = inlined_call_operand.vmem [shape: f32[32,4], index: 5, kind: input, shape index: {}]
  %s6 = inlined_call_operand.vmem [shape: f32[2,8,4], index: 6, kind: output, shape index: {0}]
  %s7 = inlined_call_operand.hbm [shape: f32[1,2,32], index: 7, kind: output, shape index: {1}]
  %8 = xla_tuple %s6, %s7
  %s9 = sld [smem:[#allocation0]]
  $region42: #{rnn_model_forward.1} parent=0
    _
  %s11 = ssub.s32 1, %s9
  %s12 = scalar_select 0, %s11, %s9
  $region1: #{rnn_model_forward.1} parent=0
    #allocation2 [shape = 'u8[1024]{0}', space=vmem, size = 0x400, scoped, tag = 'output window, operand 1, single buffered']
    #allocation3 [shape = 's32[1]{0}', space=sflag, size = 0x4, scoped, tag = 'scoped memory for rnn_model_forward.1']
    %13 = vsyncpa [#allocation3], 0
    // Predicated region
    $region2: #{rnn_model_forward.1} parent=1 // pred_check
      _
    $region3: #{rnn_model_forward.1} parent=1 // pred_check_branch
      %15 = sbr.rel (0) target = $region5
    $region4: #{rnn_model_forward.1} parent=1 // pred_region
      _
    $region5: #{rnn_model_forward.1} parent=1 // pred_fallthru
      _
    // Predicated region
    $region6: #{rnn_model_forward.1} parent=1 // pred_check
      _
    $region7: #{rnn_model_forward.1} parent=1 // pred_check_branch
      %17 = sbr.rel (0) target = $region9
    $region8: #{rnn_model_forward.1} parent=1 // pred_region
      _
    $region9: #{rnn_model_forward.1} parent=1 // pred_fallthru
      _
    // Predicated region
    $region10: #{rnn_model_forward.1} parent=1 // pred_check
      _
    $region11: #{rnn_model_forward.1} parent=1 // pred_check_branch
      %19 = sbr.rel (0) target = $region13
    $region12: #{rnn_model_forward.1} parent=1 // pred_region
      _
    $region13: #{rnn_model_forward.1} parent=1 // pred_fallthru
      _
    // Predicated region
    $region14: #{rnn_model_forward.1} parent=1 // pred_check
      _
    $region15: #{rnn_model_forward.1} parent=1 // pred_check_branch
      %21 = sbr.rel (0) target = $region17
    $region16: #{rnn_model_forward.1} parent=1 // pred_region
      _
    $region17: #{rnn_model_forward.1} parent=1 // pred_fallthru
      _
    // Predicated region
    $region18: #{rnn_model_forward.1} parent=1 // pred_check
      _
    $region19: #{rnn_model_forward.1} parent=1 // pred_check_branch
      %23 = sbr.rel (0) target = $region21
    $region20: #{rnn_model_forward.1} parent=1 // pred_region
      _
    $region21: #{rnn_model_forward.1} parent=1 // pred_fallthru
      _
    // Predicated region
    $region22: #{rnn_model_forward.1} parent=1 // pred_check
      _
    $region23: #{rnn_model_forward.1} parent=1 // pred_check_branch
      %25 = sbr.rel (0) target = $region25
    $region24: #{rnn_model_forward.1} parent=1 // pred_region
      _
    $region25: #{rnn_model_forward.1} parent=1 // pred_fallthru
      _
    %v26 = vld [vmem:[%s0] sm:$0xff]
    %v27 = vld [vmem:[%s0 + $0x8] sm:$0xff]
    %v28 = vld [vmem:[%s2] sm:$0xf]
    %v29 = vld [vmem:[%s4] sm:$0x1]
    %v30 = vlaneseq
    %v31 = vshrl.u32 %v30, 7
    %v32 = vsub.s32 0, %v31
    %v33 = vrot.slane %v29, %v32
    %vm34 = vcmask 31744
    %v36 = vsel %vm34, %v26, 0
    %v39 = vsel %vm34, %v27, 0
    %vm41 = vcmask 1043456
    %v43 = vsel %vm41, %v28, 0
    %45 = vmatprep.subr.mxu0 0.0
    %46 = vmatpush1.msra.mxu0 %v43
    %47 = vmatprep.subr.mxu0 0.0
    %48 = vmatpush1.msra.mxu0 0.0
    %49 = vmatprep.subr.mxu0 0.0
    %50 = vmatpush1.msra.mxu0 0.0
    %51 = vmatprep.subr.mxu0 0.0
    %52 = vmatpush1.msra.mxu0 0.0
    %53 = vmatprep.subr.mxu0 0.0
    %54 = vmatpush1.msra.mxu0 0.0
    %55 = vmatprep.subr.mxu0 0.0
    %56 = vmatpush1.msra.mxu0 0.0
    %57 = vmatprep.subr.mxu0 0.0
    %58 = vmatpush1.msra.mxu0 0.0
    %59 = vmatprep.subr.mxu0 0.0
    %60 = vmatpush1.msra.mxu0 0.0
    %61 = vmatprep.subr.mxu0 0.0
    %62 = vmatpush1.msra.mxu0 0.0
    %63 = vmatprep.subr.mxu0 0.0
    %64 = vmatpush1.msra.mxu0 0.0
    %65 = vmatprep.subr.mxu0 0.0
    %66 = vmatpush1.msra.mxu0 0.0
    %67 = vmatprep.subr.mxu0 0.0
    %68 = vmatpush1.msra.mxu0 0.0
    %69 = vmatprep.subr.mxu0 0.0
    %70 = vmatpush1.msra.mxu0 0.0
    %71 = vmatprep.subr.mxu0 0.0
    %72 = vmatpush1.msra.mxu0 0.0
    %73 = vmatprep.subr.mxu0 0.0
    %74 = vmatpush1.msra.mxu0 0.0
    %75 = vmatprep.subr.mxu0 0.0
    %76 = vmatpush1.msra.mxu0 0.0
    %77 = vmatprep.subr.mxu0 0.0
    %78 = vmatpush1.msra.mxu0 0.0
    %79 = vmatprep.subr.mxu0 0.0
    %80 = vmatpush1.msra.mxu0 0.0
    %81 = vmatprep.subr.mxu0 0.0
    %82 = vmatpush1.msra.mxu0 0.0
    %83 = vmatprep.subr.mxu0 0.0
    %84 = vmatpush1.msra.mxu0 0.0
    %85 = vmatprep.subr.mxu0 0.0
    %86 = vmatpush1.msra.mxu0 0.0
    %87 = vmatprep.subr.mxu0 0.0
    %88 = vmatpush1.msra.mxu0 0.0
    %89 = vmatprep.subr.mxu0 0.0
    %90 = vmatpush1.msra.mxu0 0.0
    %91 = vmatprep.subr.mxu0 0.0
    %92 = vmatpush1.msra.mxu0 0.0
    %93 = vmatprep.subr.mxu0 0.0
    %94 = vmatpush1.msra.mxu0 0.0
    %95 = vmatprep.subr.mxu0 0.0
    %96 = vmatpush1.msra.mxu0 0.0
    %97 = vmatprep.subr.mxu0 0.0
    %98 = vmatpush1.msra.mxu0 0.0
    %99 = vmatprep.subr.mxu0 0.0
    %100 = vmatpush1.msra.mxu0 0.0
    %101 = vmatprep.subr.mxu0 0.0
    %102 = vmatpush1.msra.mxu0 0.0
    %103 = vmatprep.subr.mxu0 0.0
    %104 = vmatpush1.msra.mxu0 0.0
    %105 = vmatprep.subr.mxu0 0.0
    %106 = vmatpush1.msra.mxu0 0.0
    %107 = vmatprep.subr.mxu0 0.0
    %108 = vmatpush1.msra.mxu0 0.0
    %109 = vmatprep.mubr.f32.mxu0 0.0
    %110 = vmatmul.mubr.f32.gmra.mrb[0].mxu0 %v36
    %v111 = vpop.f32.mrb[0].mxu0
    %v112 = vadd.f32 %v33, %v111
    %v113 = vpop.f32.mrb[0].mxu0
    %114 = vmatprep.mubr.f32.mxu0 0.0
    %115 = vmatmul.mubr.f32.gmra.mrb[0].mxu0 %v39
    %v116 = vpop.f32.mrb[0].mxu0
    %v117 = vadd.f32 %v33, %v116
    %v118 = vpop.f32.mrb[0].mxu0
    %119 = vdwg.mxu0
    %v120 = vld [vmem:[%s3] sm:$0xff]
    %v121 = vld [vmem:[%s3 + $0x8] sm:$0xff]
    %v122 = vld [vmem:[%s3 + $0x10] sm:$0xff]
    %v123 = vld [vmem:[%s3 + $0x18] sm:$0xff]
    %v124 = vld [vmem:[%s4 + $0x1] sm:$0x1]
    %v125 = vlaneseq
    %v126 = vshrl.u32 %v125, 7
    %v127 = vsub.s32 0, %v126
    %v128 = vrot.slane %v124, %v127
    %v129 = vld [vmem:[%s1] sm:$0x3]
    %vm130 = vcmask 261120
    %v132 = vsel %vm130, %v129, 0
    %134 = vmatprep.subr.mxu0 0.0
    %135 = vmatpush1.msra.mxu0 %v120
    %136 = vmatprep.subr.mxu0 0.0
    %137 = vmatpush1.msra.mxu0 %v121
    %138 = vmatprep.subr.mxu0 0.0
    %139 = vmatpush1.msra.mxu0 %v122
    %140 = vmatprep.subr.mxu0 0.0
    %141 = vmatpush1.msra.mxu0 %v123
    %142 = vmatprep.subr.mxu0 0.0
    %143 = vmatpush1.msra.mxu0 0.0
    %144 = vmatprep.subr.mxu0 0.0
    %145 = vmatpush1.msra.mxu0 0.0
    %146 = vmatprep.subr.mxu0 0.0
    %147 = vmatpush1.msra.mxu0 0.0
    %148 = vmatprep.subr.mxu0 0.0
    %149 = vmatpush1.msra.mxu0 0.0
    %150 = vmatprep.subr.mxu0 0.0
    %151 = vmatpush1.msra.mxu0 0.0
    %152 = vmatprep.subr.mxu0 0.0
    %153 = vmatpush1.msra.mxu0 0.0
    %154 = vmatprep.subr.mxu0 0.0
    %155 = vmatpush1.msra.mxu0 0.0
    %156 = vmatprep.subr.mxu0 0.0
    %157 = vmatpush1.msra.mxu0 0.0
    %158 = vmatprep.subr.mxu0 0.0
    %159 = vmatpush1.msra.mxu0 0.0
    %160 = vmatprep.subr.mxu0 0.0
    %161 = vmatpush1.msra.mxu0 0.0
    %162 = vmatprep.subr.mxu0 0.0
    %163 = vmatpush1.msra.mxu0 0.0
    %164 = vmatprep.subr.mxu0 0.0
    %165 = vmatpush1.msra.mxu0 0.0
    %166 = vmatprep.subr.mxu0 0.0
    %167 = vmatpush1.msra.mxu0 0.0
    %168 = vmatprep.subr.mxu0 0.0
    %169 = vmatpush1.msra.mxu0 0.0
    %170 = vmatprep.subr.mxu0 0.0
    %171 = vmatpush1.msra.mxu0 0.0
    %172 = vmatprep.subr.mxu0 0.0
    %173 = vmatpush1.msra.mxu0 0.0
    %174 = vmatprep.subr.mxu0 0.0
    %175 = vmatpush1.msra.mxu0 0.0
    %176 = vmatprep.subr.mxu0 0.0
    %177 = vmatpush1.msra.mxu0 0.0
    %178 = vmatprep.subr.mxu0 0.0
    %179 = vmatpush1.msra.mxu0 0.0
    %180 = vmatprep.subr.mxu0 0.0
    %181 = vmatpush1.msra.mxu0 0.0
    %182 = vmatprep.subr.mxu0 0.0
    %183 = vmatpush1.msra.mxu0 0.0
    %184 = vmatprep.subr.mxu0 0.0
    %185 = vmatpush1.msra.mxu0 0.0
    %186 = vmatprep.subr.mxu0 0.0
    %187 = vmatpush1.msra.mxu0 0.0
    %188 = vmatprep.subr.mxu0 0.0
    %189 = vmatpush1.msra.mxu0 0.0
    %190 = vmatprep.subr.mxu0 0.0
    %191 = vmatpush1.msra.mxu0 0.0
    %192 = vmatprep.subr.mxu0 0.0
    %193 = vmatpush1.msra.mxu0 0.0
    %194 = vmatprep.subr.mxu0 0.0
    %195 = vmatpush1.msra.mxu0 0.0
    %196 = vmatprep.subr.mxu0 0.0
    %197 = vmatpush1.msra.mxu0 0.0
    %198 = vmatprep.mubr.f32.mxu0 0.0
    %199 = vmatmul.mubr.f32.gmra.mrb[0].mxu0 %v132
    %v200 = vpop.f32.mrb[0].mxu0
    %v201 = vadd.f32 %v128, %v200
    %v202 = vpop.f32.mrb[0].mxu0
    %203 = vdwg.mxu0
    %v205 = vrot.slane %v201, 1
    %v208 = vadd.f32 %v112, %v201
    %v209 = vadd.f32 %v117, %v205
    %v210 = vxor.u32 %v208, 2147483648
    %v211 = vxor.u32 %v209, 2147483648
    %v212 = vmul.f32 %v210, 1.442695
    %v213 = vpow.pop %v212
    %v214 = vmul.f32 %v211, 1.442695
    %v215 = vpow.pop %v214
    %v216 = vadd.f32 %v213, 1.0
    %v217 = vadd.f32 %v215, 1.0
    %v218 = vrcp.pop %v216
    %v219 = vmul.f32 1.0, %v218
    %v220 = vrcp.pop %v217
    %v221 = vmul.f32 1.0, %v220
    %222 = vrot.lane.b32.xlu0 %v201, 64
    %v223 = vpop.permute.xlu0 %222
    %224 = vrot.lane.b32.xlu0 %v205, 64
    %v225 = vpop.permute.xlu0 %224
    %v228 = vmul.f32 %v219, %v223
    %v229 = vmul.f32 %v221, %v225
    %232 = vrot.lane.b32.xlu0 %v228, 64
    %v233 = vpop.permute.xlu0 %232
    %234 = vrot.lane.b32.xlu0 %v229, 64
    %v235 = vpop.permute.xlu0 %234
    %v238 = vadd.f32 %v112, %v233
    %v239 = vadd.f32 %v117, %v235
    %v240 = vtanh.pop %v238
    %v241 = vtanh.pop %v239
    %v242 = vsub.f32 1.0, %v219
    %v243 = vsub.f32 1.0, %v221
    %246 = vrot.lane.b32.xlu0 %v240, 96
    %v247 = vpop.permute.xlu0 %246
    %248 = vrot.lane.b32.xlu0 %v241, 96
    %v249 = vpop.permute.xlu0 %248
    %v252 = vmul.f32 %v242, %v247
    %v253 = vmul.f32 %v243, %v249
    %v254 = vrot.slane %v129, 1
    %255 = vrot.lane.b32.xlu0 %v129, 32
    %v256 = vpop.permute.xlu0 %255
    %257 = vrot.lane.b32.xlu0 %v254, 32
    %v258 = vpop.permute.xlu0 %257
    %v261 = vmul.f32 %v219, %v256
    %v262 = vmul.f32 %v221, %v258
    %v263 = vadd.f32 %v252, %v261
    %v264 = vadd.f32 %v253, %v262
    %v267 = vrot.slane %v264, 7
    %vm268 = vcmask 1041409
    %v269 = vsel %vm268, %v267, %v263
    %270 = vrot.lane.b32.xlu0 %v269, 96
    %v271 = vpop.permute.xlu0 %270
    %v272 = vsel %vm130, %v271, 0
    %274 = vmatprep.subr.mxu0 0.0
    %275 = vmatpush1.msra.mxu0 %v120
    %276 = vmatprep.subr.mxu0 0.0
    %277 = vmatpush1.msra.mxu0 %v121
    %278 = vmatprep.subr.mxu0 0.0
    %279 = vmatpush1.msra.mxu0 %v122
    %280 = vmatprep.subr.mxu0 0.0
    %281 = vmatpush1.msra.mxu0 %v123
    %282 = vmatprep.subr.mxu0 0.0
    %283 = vmatpush1.msra.mxu0 0.0
    %284 = vmatprep.subr.mxu0 0.0
    %285 = vmatpush1.msra.mxu0 0.0
    %286 = vmatprep.subr.mxu0 0.0
    %287 = vmatpush1.msra.mxu0 0.0
    %288 = vmatprep.subr.mxu0 0.0
    %289 = vmatpush1.msra.mxu0 0.0
    %290 = vmatprep.subr.mxu0 0.0
    %291 = vmatpush1.msra.mxu0 0.0
    %292 = vmatprep.subr.mxu0 0.0
    %293 = vmatpush1.msra.mxu0 0.0
    %294 = vmatprep.subr.mxu0 0.0
    %295 = vmatpush1.msra.mxu0 0.0
    %296 = vmatprep.subr.mxu0 0.0
    %297 = vmatpush1.msra.mxu0 0.0
    %298 = vmatprep.subr.mxu0 0.0
    %299 = vmatpush1.msra.mxu0 0.0
    %300 = vmatprep.subr.mxu0 0.0
    %301 = vmatpush1.msra.mxu0 0.0
    %302 = vmatprep.subr.mxu0 0.0
    %303 = vmatpush1.msra.mxu0 0.0
    %304 = vmatprep.subr.mxu0 0.0
    %305 = vmatpush1.msra.mxu0 0.0
    %306 = vmatprep.subr.mxu0 0.0
    %307 = vmatpush1.msra.mxu0 0.0
    %308 = vmatprep.subr.mxu0 0.0
    %309 = vmatpush1.msra.mxu0 0.0
    %310 = vmatprep.subr.mxu0 0.0
    %311 = vmatpush1.msra.mxu0 0.0
    %312 = vmatprep.subr.mxu0 0.0
    %313 = vmatpush1.msra.mxu0 0.0
    %314 = vmatprep.subr.mxu0 0.0
    %315 = vmatpush1.msra.mxu0 0.0
    %316 = vmatprep.subr.mxu0 0.0
    %317 = vmatpush1.msra.mxu0 0.0
    %318 = vmatprep.subr.mxu0 0.0
    %319 = vmatpush1.msra.mxu0 0.0
    %320 = vmatprep.subr.mxu0 0.0
    %321 = vmatpush1.msra.mxu0 0.0
    %322 = vmatprep.subr.mxu0 0.0
    %323 = vmatpush1.msra.mxu0 0.0
    %324 = vmatprep.subr.mxu0 0.0
    %325 = vmatpush1.msra.mxu0 0.0
    %326 = vmatprep.subr.mxu0 0.0
    %327 = vmatpush1.msra.mxu0 0.0
    %328 = vmatprep.subr.mxu0 0.0
    %329 = vmatpush1.msra.mxu0 0.0
    %330 = vmatprep.subr.mxu0 0.0
    %331 = vmatpush1.msra.mxu0 0.0
    %332 = vmatprep.subr.mxu0 0.0
    %333 = vmatpush1.msra.mxu0 0.0
    %334 = vmatprep.subr.mxu0 0.0
    %335 = vmatpush1.msra.mxu0 0.0
    %336 = vmatprep.subr.mxu0 0.0
    %337 = vmatpush1.msra.mxu0 0.0
    %338 = vmatprep.mubr.f32.mxu0 0.0
    %339 = vmatmul.mubr.f32.gmra.mrb[0].mxu0 %v272
    %v340 = vpop.f32.mrb[0].mxu0
    %v341 = vadd.f32 %v128, %v340
    %v342 = vpop.f32.mrb[0].mxu0
    %343 = vdwg.mxu0
    %v345 = vrot.slane %v341, 7
    %v348 = vadd.f32 %v112, %v345
    %v349 = vadd.f32 %v117, %v341
    %v350 = vxor.u32 %v348, 2147483648
    %v351 = vxor.u32 %v349, 2147483648
    %v352 = vmul.f32 %v350, 1.442695
    %v353 = vpow.pop %v352
    %v354 = vmul.f32 %v351, 1.442695
    %v355 = vpow.pop %v354
    %v356 = vadd.f32 %v353, 1.0
    %v357 = vadd.f32 %v355, 1.0
    %v358 = vrcp.pop %v356
    %v359 = vmul.f32 1.0, %v358
    %v360 = vrcp.pop %v357
    %v361 = vmul.f32 1.0, %v360
    %362 = vrot.lane.b32.xlu0 %v345, 64
    %v363 = vpop.permute.xlu0 %362
    %364 = vrot.lane.b32.xlu0 %v341, 64
    %v365 = vpop.permute.xlu0 %364
    %v368 = vmul.f32 %v359, %v363
    %v369 = vmul.f32 %v361, %v365
    %372 = vrot.lane.b32.xlu0 %v368, 64
    %v373 = vpop.permute.xlu0 %372
    %374 = vrot.lane.b32.xlu0 %v369, 64
    %v375 = vpop.permute.xlu0 %374
    %v378 = vadd.f32 %v112, %v373
    %v379 = vadd.f32 %v117, %v375
    %v380 = vtanh.pop %v378
    %v381 = vtanh.pop %v379
    %v382 = vsub.f32 1.0, %v359
    %v383 = vsub.f32 1.0, %v361
    %386 = vrot.lane.b32.xlu0 %v380, 96
    %v387 = vpop.permute.xlu0 %386
    %388 = vrot.lane.b32.xlu0 %v381, 96
    %v389 = vpop.permute.xlu0 %388
    %v392 = vmul.f32 %v382, %v387
    %v393 = vmul.f32 %v383, %v389
    %v394 = vrot.slane %v263, 7
    %v397 = vmul.f32 %v359, %v394
    %v398 = vmul.f32 %v361, %v267
    %v399 = vadd.f32 %v392, %v397
    %v400 = vadd.f32 %v393, %v398
    %v403 = vrot.slane %v399, 1
    %v404 = vsel %vm268, %v400, %v403
    %405 = vrot.lane.b32.xlu0 %v404, 96
    %v406 = vpop.permute.xlu0 %405
    %v407 = vsel %vm130, %v406, 0
    %409 = vmatprep.subr.mxu0 0.0
    %410 = vmatpush1.msra.mxu0 %v120
    %411 = vmatprep.subr.mxu0 0.0
    %412 = vmatpush1.msra.mxu0 %v121
    %413 = vmatprep.subr.mxu0 0.0
    %414 = vmatpush1.msra.mxu0 %v122
    %415 = vmatprep.subr.mxu0 0.0
    %416 = vmatpush1.msra.mxu0 %v123
    %417 = vmatprep.subr.mxu0 0.0
    %418 = vmatpush1.msra.mxu0 0.0
    %419 = vmatprep.subr.mxu0 0.0
    %420 = vmatpush1.msra.mxu0 0.0
    %421 = vmatprep.subr.mxu0 0.0
    %422 = vmatpush1.msra.mxu0 0.0
    %423 = vmatprep.subr.mxu0 0.0
    %424 = vmatpush1.msra.mxu0 0.0
    %425 = vmatprep.subr.mxu0 0.0
    %426 = vmatpush1.msra.mxu0 0.0
    %427 = vmatprep.subr.mxu0 0.0
    %428 = vmatpush1.msra.mxu0 0.0
    %429 = vmatprep.subr.mxu0 0.0
    %430 = vmatpush1.msra.mxu0 0.0
    %431 = vmatprep.subr.mxu0 0.0
    %432 = vmatpush1.msra.mxu0 0.0
    %433 = vmatprep.subr.mxu0 0.0
    %434 = vmatpush1.msra.mxu0 0.0
    %435 = vmatprep.subr.mxu0 0.0
    %436 = vmatpush1.msra.mxu0 0.0
    %437 = vmatprep.subr.mxu0 0.0
    %438 = vmatpush1.msra.mxu0 0.0
    %439 = vmatprep.subr.mxu0 0.0
    %440 = vmatpush1.msra.mxu0 0.0
    %441 = vmatprep.subr.mxu0 0.0
    %442 = vmatpush1.msra.mxu0 0.0
    %443 = vmatprep.subr.mxu0 0.0
    %444 = vmatpush1.msra.mxu0 0.0
    %445 = vmatprep.subr.mxu0 0.0
    %446 = vmatpush1.msra.mxu0 0.0
    %447 = vmatprep.subr.mxu0 0.0
    %448 = vmatpush1.msra.mxu0 0.0
    %449 = vmatprep.subr.mxu0 0.0
    %450 = vmatpush1.msra.mxu0 0.0
    %451 = vmatprep.subr.mxu0 0.0
    %452 = vmatpush1.msra.mxu0 0.0
    %453 = vmatprep.subr.mxu0 0.0
    %454 = vmatpush1.msra.mxu0 0.0
    %455 = vmatprep.subr.mxu0 0.0
    %456 = vmatpush1.msra.mxu0 0.0
    %457 = vmatprep.subr.mxu0 0.0
    %458 = vmatpush1.msra.mxu0 0.0
    %459 = vmatprep.subr.mxu0 0.0
    %460 = vmatpush1.msra.mxu0 0.0
    %461 = vmatprep.subr.mxu0 0.0
    %462 = vmatpush1.msra.mxu0 0.0
    %463 = vmatprep.subr.mxu0 0.0
    %464 = vmatpush1.msra.mxu0 0.0
    %465 = vmatprep.subr.mxu0 0.0
    %466 = vmatpush1.msra.mxu0 0.0
    %467 = vmatprep.subr.mxu0 0.0
    %468 = vmatpush1.msra.mxu0 0.0
    %469 = vmatprep.subr.mxu0 0.0
    %470 = vmatpush1.msra.mxu0 0.0
    %471 = vmatprep.subr.mxu0 0.0
    %472 = vmatpush1.msra.mxu0 0.0
    %473 = vmatprep.mubr.f32.mxu0 0.0
    %474 = vmatmul.mubr.f32.gmra.mrb[0].mxu0 %v407
    %v475 = vpop.f32.mrb[0].mxu0
    %v476 = vadd.f32 %v128, %v475
    %v477 = vpop.f32.mrb[0].mxu0
    %478 = vdwg.mxu0
    %v480 = vrot.slane %v476, 6
    %v481 = vrot.slane %v476, 7
    %v484 = vadd.f32 %v112, %v480
    %v485 = vadd.f32 %v117, %v481
    %v486 = vxor.u32 %v484, 2147483648
    %v487 = vxor.u32 %v485, 2147483648
    %v488 = vmul.f32 %v486, 1.442695
    %v489 = vpow.pop %v488
    %v490 = vmul.f32 %v487, 1.442695
    %v491 = vpow.pop %v490
    %v492 = vadd.f32 %v489, 1.0
    %v493 = vadd.f32 %v491, 1.0
    %v494 = vrcp.pop %v492
    %v495 = vmul.f32 1.0, %v494
    %v496 = vrcp.pop %v493
    %v497 = vmul.f32 1.0, %v496
    %498 = vrot.lane.b32.xlu0 %v480, 64
    %v499 = vpop.permute.xlu0 %498
    %500 = vrot.lane.b32.xlu0 %v481, 64
    %v501 = vpop.permute.xlu0 %500
    %v504 = vmul.f32 %v495, %v499
    %v505 = vmul.f32 %v497, %v501
    %508 = vrot.lane.b32.xlu0 %v504, 64
    %v509 = vpop.permute.xlu0 %508
    %510 = vrot.lane.b32.xlu0 %v505, 64
    %v511 = vpop.permute.xlu0 %510
    %v514 = vadd.f32 %v112, %v509
    %v515 = vadd.f32 %v117, %v511
    %v516 = vtanh.pop %v514
    %v517 = vtanh.pop %v515
    %v518 = vsub.f32 1.0, %v495
    %v519 = vsub.f32 1.0, %v497
    %522 = vrot.lane.b32.xlu0 %v516, 96
    %v523 = vpop.permute.xlu0 %522
    %524 = vrot.lane.b32.xlu0 %v517, 96
    %v525 = vpop.permute.xlu0 %524
    %v528 = vmul.f32 %v518, %v523
    %v529 = vmul.f32 %v519, %v525
    %v530 = vrot.slane %v399, 7
    %v531 = vrot.slane %v400, 7
    %v534 = vmul.f32 %v495, %v530
    %v535 = vmul.f32 %v497, %v531
    %v536 = vadd.f32 %v528, %v534
    %v537 = vadd.f32 %v529, %v535
    %v540 = vrot.slane %v536, 2
    %v541 = vrot.slane %v537, 1
    %v542 = vsel %vm268, %v541, %v540
    %543 = vrot.lane.b32.xlu0 %v542, 96
    %v544 = vpop.permute.xlu0 %543
    %v545 = vsel %vm130, %v544, 0
    %547 = vmatprep.subr.mxu0 0.0
    %548 = vmatpush1.msra.mxu0 %v120
    %549 = vmatprep.subr.mxu0 0.0
    %550 = vmatpush1.msra.mxu0 %v121
    %551 = vmatprep.subr.mxu0 0.0
    %552 = vmatpush1.msra.mxu0 %v122
    %553 = vmatprep.subr.mxu0 0.0
    %554 = vmatpush1.msra.mxu0 %v123
    %555 = vmatprep.subr.mxu0 0.0
    %556 = vmatpush1.msra.mxu0 0.0
    %557 = vmatprep.subr.mxu0 0.0
    %558 = vmatpush1.msra.mxu0 0.0
    %559 = vmatprep.subr.mxu0 0.0
    %560 = vmatpush1.msra.mxu0 0.0
    %561 = vmatprep.subr.mxu0 0.0
    %562 = vmatpush1.msra.mxu0 0.0
    %563 = vmatprep.subr.mxu0 0.0
    %564 = vmatpush1.msra.mxu0 0.0
    %565 = vmatprep.subr.mxu0 0.0
    %566 = vmatpush1.msra.mxu0 0.0
    %567 = vmatprep.subr.mxu0 0.0
    %568 = vmatpush1.msra.mxu0 0.0
    %569 = vmatprep.subr.mxu0 0.0
    %570 = vmatpush1.msra.mxu0 0.0
    %571 = vmatprep.subr.mxu0 0.0
    %572 = vmatpush1.msra.mxu0 0.0
    %573 = vmatprep.subr.mxu0 0.0
    %574 = vmatpush1.msra.mxu0 0.0
    %575 = vmatprep.subr.mxu0 0.0
    %576 = vmatpush1.msra.mxu0 0.0
    %577 = vmatprep.subr.mxu0 0.0
    %578 = vmatpush1.msra.mxu0 0.0
    %579 = vmatprep.subr.mxu0 0.0
    %580 = vmatpush1.msra.mxu0 0.0
    %581 = vmatprep.subr.mxu0 0.0
    %582 = vmatpush1.msra.mxu0 0.0
    %583 = vmatprep.subr.mxu0 0.0
    %584 = vmatpush1.msra.mxu0 0.0
    %585 = vmatprep.subr.mxu0 0.0
    %586 = vmatpush1.msra.mxu0 0.0
    %587 = vmatprep.subr.mxu0 0.0
    %588 = vmatpush1.msra.mxu0 0.0
    %589 = vmatprep.subr.mxu0 0.0
    %590 = vmatpush1.msra.mxu0 0.0
    %591 = vmatprep.subr.mxu0 0.0
    %592 = vmatpush1.msra.mxu0 0.0
    %593 = vmatprep.subr.mxu0 0.0
    %594 = vmatpush1.msra.mxu0 0.0
    %595 = vmatprep.subr.mxu0 0.0
    %596 = vmatpush1.msra.mxu0 0.0
    %597 = vmatprep.subr.mxu0 0.0
    %598 = vmatpush1.msra.mxu0 0.0
    %599 = vmatprep.subr.mxu0 0.0
    %600 = vmatpush1.msra.mxu0 0.0
    %601 = vmatprep.subr.mxu0 0.0
    %602 = vmatpush1.msra.mxu0 0.0
    %603 = vmatprep.subr.mxu0 0.0
    %604 = vmatpush1.msra.mxu0 0.0
    %605 = vmatprep.subr.mxu0 0.0
    %606 = vmatpush1.msra.mxu0 0.0
    %607 = vmatprep.subr.mxu0 0.0
    %608 = vmatpush1.msra.mxu0 0.0
    %609 = vmatprep.subr.mxu0 0.0
    %610 = vmatpush1.msra.mxu0 0.0
    %611 = vmatprep.mubr.f32.mxu0 0.0
    %612 = vmatmul.mubr.f32.gmra.mrb[0].mxu0 %v545
    %v613 = vpop.f32.mrb[0].mxu0
    %v614 = vadd.f32 %v128, %v613
    %v615 = vpop.f32.mrb[0].mxu0
    %616 = vdwg.mxu0
    %v618 = vrot.slane %v614, 5
    %v619 = vrot.slane %v614, 6
    %v622 = vadd.f32 %v112, %v618
    %v623 = vadd.f32 %v117, %v619
    %v624 = vxor.u32 %v622, 2147483648
    %v625 = vxor.u32 %v623, 2147483648
    %v626 = vmul.f32 %v624, 1.442695
    %v627 = vpow.pop %v626
    %v628 = vmul.f32 %v625, 1.442695
    %v629 = vpow.pop %v628
    %v630 = vadd.f32 %v627, 1.0
    %v631 = vadd.f32 %v629, 1.0
    %v632 = vrcp.pop %v630
    %v633 = vmul.f32 1.0, %v632
    %v634 = vrcp.pop %v631
    %v635 = vmul.f32 1.0, %v634
    %636 = vrot.lane.b32.xlu0 %v618, 64
    %v637 = vpop.permute.xlu0 %636
    %638 = vrot.lane.b32.xlu0 %v619, 64
    %v639 = vpop.permute.xlu0 %638
    %v642 = vmul.f32 %v633, %v637
    %v643 = vmul.f32 %v635, %v639
    %646 = vrot.lane.b32.xlu0 %v642, 64
    %v647 = vpop.permute.xlu0 %646
    %648 = vrot.lane.b32.xlu0 %v643, 64
    %v649 = vpop.permute.xlu0 %648
    %v652 = vadd.f32 %v112, %v647
    %v653 = vadd.f32 %v117, %v649
    %v654 = vtanh.pop %v652
    %v655 = vtanh.pop %v653
    %v656 = vsub.f32 1.0, %v633
    %v657 = vsub.f32 1.0, %v635
    %660 = vrot.lane.b32.xlu0 %v654, 96
    %v661 = vpop.permute.xlu0 %660
    %662 = vrot.lane.b32.xlu0 %v655, 96
    %v663 = vpop.permute.xlu0 %662
    %v666 = vmul.f32 %v656, %v661
    %v667 = vmul.f32 %v657, %v663
    %v668 = vrot.slane %v536, 7
    %v669 = vrot.slane %v537, 7
    %v672 = vmul.f32 %v633, %v668
    %v673 = vmul.f32 %v635, %v669
    %v674 = vadd.f32 %v666, %v672
    %v675 = vadd.f32 %v667, %v673
    %v678 = vrot.slane %v674, 3
    %v679 = vrot.slane %v675, 2
    %v680 = vsel %vm268, %v679, %v678
    %681 = vrot.lane.b32.xlu0 %v680, 96
    %v682 = vpop.permute.xlu0 %681
    %v683 = vsel %vm130, %v682, 0
    %685 = vmatprep.subr.mxu0 0.0
    %686 = vmatpush1.msra.mxu0 %v120
    %687 = vmatprep.subr.mxu0 0.0
    %688 = vmatpush1.msra.mxu0 %v121
    %689 = vmatprep.subr.mxu0 0.0
    %690 = vmatpush1.msra.mxu0 %v122
    %691 = vmatprep.subr.mxu0 0.0
    %692 = vmatpush1.msra.mxu0 %v123
    %693 = vmatprep.subr.mxu0 0.0
    %694 = vmatpush1.msra.mxu0 0.0
    %695 = vmatprep.subr.mxu0 0.0
    %696 = vmatpush1.msra.mxu0 0.0
    %697 = vmatprep.subr.mxu0 0.0
    %698 = vmatpush1.msra.mxu0 0.0
    %699 = vmatprep.subr.mxu0 0.0
    %700 = vmatpush1.msra.mxu0 0.0
    %701 = vmatprep.subr.mxu0 0.0
    %702 = vmatpush1.msra.mxu0 0.0
    %703 = vmatprep.subr.mxu0 0.0
    %704 = vmatpush1.msra.mxu0 0.0
    %705 = vmatprep.subr.mxu0 0.0
    %706 = vmatpush1.msra.mxu0 0.0
    %707 = vmatprep.subr.mxu0 0.0
    %708 = vmatpush1.msra.mxu0 0.0
    %709 = vmatprep.subr.mxu0 0.0
    %710 = vmatpush1.msra.mxu0 0.0
    %711 = vmatprep.subr.mxu0 0.0
    %712 = vmatpush1.msra.mxu0 0.0
    %713 = vmatprep.subr.mxu0 0.0
    %714 = vmatpush1.msra.mxu0 0.0
    %715 = vmatprep.subr.mxu0 0.0
    %716 = vmatpush1.msra.mxu0 0.0
    %717 = vmatprep.subr.mxu0 0.0
    %718 = vmatpush1.msra.mxu0 0.0
    %719 = vmatprep.subr.mxu0 0.0
    %720 = vmatpush1.msra.mxu0 0.0
    %721 = vmatprep.subr.mxu0 0.0
    %722 = vmatpush1.msra.mxu0 0.0
    %723 = vmatprep.subr.mxu0 0.0
    %724 = vmatpush1.msra.mxu0 0.0
    %725 = vmatprep.subr.mxu0 0.0
    %726 = vmatpush1.msra.mxu0 0.0
    %727 = vmatprep.subr.mxu0 0.0
    %728 = vmatpush1.msra.mxu0 0.0
    %729 = vmatprep.subr.mxu0 0.0
    %730 = vmatpush1.msra.mxu0 0.0
    %731 = vmatprep.subr.mxu0 0.0
    %732 = vmatpush1.msra.mxu0 0.0
    %733 = vmatprep.subr.mxu0 0.0
    %734 = vmatpush1.msra.mxu0 0.0
    %735 = vmatprep.subr.mxu0 0.0
    %736 = vmatpush1.msra.mxu0 0.0
    %737 = vmatprep.subr.mxu0 0.0
    %738 = vmatpush1.msra.mxu0 0.0
    %739 = vmatprep.subr.mxu0 0.0
    %740 = vmatpush1.msra.mxu0 0.0
    %741 = vmatprep.subr.mxu0 0.0
    %742 = vmatpush1.msra.mxu0 0.0
    %743 = vmatprep.subr.mxu0 0.0
    %744 = vmatpush1.msra.mxu0 0.0
    %745 = vmatprep.subr.mxu0 0.0
    %746 = vmatpush1.msra.mxu0 0.0
    %747 = vmatprep.subr.mxu0 0.0
    %748 = vmatpush1.msra.mxu0 0.0
    %749 = vmatprep.mubr.f32.mxu0 0.0
    %750 = vmatmul.mubr.f32.gmra.mrb[0].mxu0 %v683
    %v751 = vpop.f32.mrb[0].mxu0
    %v752 = vadd.f32 %v128, %v751
    %v753 = vpop.f32.mrb[0].mxu0
    %754 = vdwg.mxu0
    %v756 = vrot.slane %v752, 4
    %v757 = vrot.slane %v752, 5
    %v760 = vadd.f32 %v112, %v756
    %v761 = vadd.f32 %v117, %v757
    %v762 = vxor.u32 %v760, 2147483648
    %v763 = vxor.u32 %v761, 2147483648
    %v764 = vmul.f32 %v762, 1.442695
    %v765 = vpow.pop %v764
    %v766 = vmul.f32 %v763, 1.442695
    %v767 = vpow.pop %v766
    %v768 = vadd.f32 %v765, 1.0
    %v769 = vadd.f32 %v767, 1.0
    %v770 = vrcp.pop %v768
    %v771 = vmul.f32 1.0, %v770
    %v772 = vrcp.pop %v769
    %v773 = vmul.f32 1.0, %v772
    %774 = vrot.lane.b32.xlu0 %v756, 64
    %v775 = vpop.permute.xlu0 %774
    %776 = vrot.lane.b32.xlu0 %v757, 64
    %v777 = vpop.permute.xlu0 %776
    %v780 = vmul.f32 %v771, %v775
    %v781 = vmul.f32 %v773, %v777
    %784 = vrot.lane.b32.xlu0 %v780, 64
    %v785 = vpop.permute.xlu0 %784
    %786 = vrot.lane.b32.xlu0 %v781, 64
    %v787 = vpop.permute.xlu0 %786
    %v790 = vadd.f32 %v112, %v785
    %v791 = vadd.f32 %v117, %v787
    %v792 = vtanh.pop %v790
    %v793 = vtanh.pop %v791
    %v794 = vsub.f32 1.0, %v771
    %v795 = vsub.f32 1.0, %v773
    %798 = vrot.lane.b32.xlu0 %v792, 96
    %v799 = vpop.permute.xlu0 %798
    %800 = vrot.lane.b32.xlu0 %v793, 96
    %v801 = vpop.permute.xlu0 %800
    %v804 = vmul.f32 %v794, %v799
    %v805 = vmul.f32 %v795, %v801
    %v806 = vrot.slane %v674, 7
    %v807 = vrot.slane %v675, 7
    %v810 = vmul.f32 %v771, %v806
    %v811 = vmul.f32 %v773, %v807
    %v812 = vadd.f32 %v804, %v810
    %v813 = vadd.f32 %v805, %v811
    %v816 = vrot.slane %v812, 4
    %v817 = vrot.slane %v813, 3
    %v818 = vsel %vm268, %v817, %v816
    %819 = vrot.lane.b32.xlu0 %v818, 96
    %v820 = vpop.permute.xlu0 %819
    %v821 = vsel %vm130, %v820, 0
    %823 = vmatprep.subr.mxu0 0.0
    %824 = vmatpush1.msra.mxu0 %v120
    %825 = vmatprep.subr.mxu0 0.0
    %826 = vmatpush1.msra.mxu0 %v121
    %827 = vmatprep.subr.mxu0 0.0
    %828 = vmatpush1.msra.mxu0 %v122
    %829 = vmatprep.subr.mxu0 0.0
    %830 = vmatpush1.msra.mxu0 %v123
    %831 = vmatprep.subr.mxu0 0.0
    %832 = vmatpush1.msra.mxu0 0.0
    %833 = vmatprep.subr.mxu0 0.0
    %834 = vmatpush1.msra.mxu0 0.0
    %835 = vmatprep.subr.mxu0 0.0
    %836 = vmatpush1.msra.mxu0 0.0
    %837 = vmatprep.subr.mxu0 0.0
    %838 = vmatpush1.msra.mxu0 0.0
    %839 = vmatprep.subr.mxu0 0.0
    %840 = vmatpush1.msra.mxu0 0.0
    %841 = vmatprep.subr.mxu0 0.0
    %842 = vmatpush1.msra.mxu0 0.0
    %843 = vmatprep.subr.mxu0 0.0
    %844 = vmatpush1.msra.mxu0 0.0
    %845 = vmatprep.subr.mxu0 0.0
    %846 = vmatpush1.msra.mxu0 0.0
    %847 = vmatprep.subr.mxu0 0.0
    %848 = vmatpush1.msra.mxu0 0.0
    %849 = vmatprep.subr.mxu0 0.0
    %850 = vmatpush1.msra.mxu0 0.0
    %851 = vmatprep.subr.mxu0 0.0
    %852 = vmatpush1.msra.mxu0 0.0
    %853 = vmatprep.subr.mxu0 0.0
    %854 = vmatpush1.msra.mxu0 0.0
    %855 = vmatprep.subr.mxu0 0.0
    %856 = vmatpush1.msra.mxu0 0.0
    %857 = vmatprep.subr.mxu0 0.0
    %858 = vmatpush1.msra.mxu0 0.0
    %859 = vmatprep.subr.mxu0 0.0
    %860 = vmatpush1.msra.mxu0 0.0
    %861 = vmatprep.subr.mxu0 0.0
    %862 = vmatpush1.msra.mxu0 0.0
    %863 = vmatprep.subr.mxu0 0.0
    %864 = vmatpush1.msra.mxu0 0.0
    %865 = vmatprep.subr.mxu0 0.0
    %866 = vmatpush1.msra.mxu0 0.0
    %867 = vmatprep.subr.mxu0 0.0
    %868 = vmatpush1.msra.mxu0 0.0
    %869 = vmatprep.subr.mxu0 0.0
    %870 = vmatpush1.msra.mxu0 0.0
    %871 = vmatprep.subr.mxu0 0.0
    %872 = vmatpush1.msra.mxu0 0.0
    %873 = vmatprep.subr.mxu0 0.0
    %874 = vmatpush1.msra.mxu0 0.0
    %875 = vmatprep.subr.mxu0 0.0
    %876 = vmatpush1.msra.mxu0 0.0
    %877 = vmatprep.subr.mxu0 0.0
    %878 = vmatpush1.msra.mxu0 0.0
    %879 = vmatprep.subr.mxu0 0.0
    %880 = vmatpush1.msra.mxu0 0.0
    %881 = vmatprep.subr.mxu0 0.0
    %882 = vmatpush1.msra.mxu0 0.0
    %883 = vmatprep.subr.mxu0 0.0
    %884 = vmatpush1.msra.mxu0 0.0
    %885 = vmatprep.subr.mxu0 0.0
    %886 = vmatpush1.msra.mxu0 0.0
    %887 = vmatprep.mubr.f32.mxu0 0.0
    %888 = vmatmul.mubr.f32.gmra.mrb[0].mxu0 %v821
    %v889 = vpop.f32.mrb[0].mxu0
    %v890 = vadd.f32 %v128, %v889
    %v891 = vpop.f32.mrb[0].mxu0
    %892 = vdwg.mxu0
    %v894 = vrot.slane %v890, 3
    %v895 = vrot.slane %v890, 4
    %v898 = vadd.f32 %v112, %v894
    %v899 = vadd.f32 %v117, %v895
    %v900 = vxor.u32 %v898, 2147483648
    %v901 = vxor.u32 %v899, 2147483648
    %v902 = vmul.f32 %v900, 1.442695
    %v903 = vpow.pop %v902
    %v904 = vmul.f32 %v901, 1.442695
    %v905 = vpow.pop %v904
    %v906 = vadd.f32 %v903, 1.0
    %v907 = vadd.f32 %v905, 1.0
    %v908 = vrcp.pop %v906
    %v909 = vmul.f32 1.0, %v908
    %v910 = vrcp.pop %v907
    %v911 = vmul.f32 1.0, %v910
    %912 = vrot.lane.b32.xlu0 %v894, 64
    %v913 = vpop.permute.xlu0 %912
    %914 = vrot.lane.b32.xlu0 %v895, 64
    %v915 = vpop.permute.xlu0 %914
    %v918 = vmul.f32 %v909, %v913
    %v919 = vmul.f32 %v911, %v915
    %922 = vrot.lane.b32.xlu0 %v918, 64
    %v923 = vpop.permute.xlu0 %922
    %924 = vrot.lane.b32.xlu0 %v919, 64
    %v925 = vpop.permute.xlu0 %924
    %v928 = vadd.f32 %v112, %v923
    %v929 = vadd.f32 %v117, %v925
    %v930 = vtanh.pop %v928
    %v931 = vtanh.pop %v929
    %v932 = vsub.f32 1.0, %v909
    %v933 = vsub.f32 1.0, %v911
    %936 = vrot.lane.b32.xlu0 %v930, 96
    %v937 = vpop.permute.xlu0 %936
    %938 = vrot.lane.b32.xlu0 %v931, 96
    %v939 = vpop.permute.xlu0 %938
    %v942 = vmul.f32 %v932, %v937
    %v943 = vmul.f32 %v933, %v939
    %v944 = vrot.slane %v812, 7
    %v945 = vrot.slane %v813, 7
    %v948 = vmul.f32 %v909, %v944
    %v949 = vmul.f32 %v911, %v945
    %v950 = vadd.f32 %v942, %v948
    %v951 = vadd.f32 %v943, %v949
    %v954 = vrot.slane %v950, 5
    %v955 = vrot.slane %v951, 4
    %v956 = vsel %vm268, %v955, %v954
    %957 = vrot.lane.b32.xlu0 %v956, 96
    %v958 = vpop.permute.xlu0 %957
    %v959 = vsel %vm130, %v958, 0
    %961 = vmatprep.subr.mxu0 0.0
    %962 = vmatpush1.msra.mxu0 %v120
    %963 = vmatprep.subr.mxu0 0.0
    %964 = vmatpush1.msra.mxu0 %v121
    %965 = vmatprep.subr.mxu0 0.0
    %966 = vmatpush1.msra.mxu0 %v122
    %967 = vmatprep.subr.mxu0 0.0
    %968 = vmatpush1.msra.mxu0 %v123
    %969 = vmatprep.subr.mxu0 0.0
    %970 = vmatpush1.msra.mxu0 0.0
    %971 = vmatprep.subr.mxu0 0.0
    %972 = vmatpush1.msra.mxu0 0.0
    %973 = vmatprep.subr.mxu0 0.0
    %974 = vmatpush1.msra.mxu0 0.0
    %975 = vmatprep.subr.mxu0 0.0
    %976 = vmatpush1.msra.mxu0 0.0
    %977 = vmatprep.subr.mxu0 0.0
    %978 = vmatpush1.msra.mxu0 0.0
    %979 = vmatprep.subr.mxu0 0.0
    %980 = vmatpush1.msra.mxu0 0.0
    %981 = vmatprep.subr.mxu0 0.0
    %982 = vmatpush1.msra.mxu0 0.0
    %983 = vmatprep.subr.mxu0 0.0
    %984 = vmatpush1.msra.mxu0 0.0
    %985 = vmatprep.subr.mxu0 0.0
    %986 = vmatpush1.msra.mxu0 0.0
    %987 = vmatprep.subr.mxu0 0.0
    %988 = vmatpush1.msra.mxu0 0.0
    %989 = vmatprep.subr.mxu0 0.0
    %990 = vmatpush1.msra.mxu0 0.0
    %991 = vmatprep.subr.mxu0 0.0
    %992 = vmatpush1.msra.mxu0 0.0
    %993 = vmatprep.subr.mxu0 0.0
    %994 = vmatpush1.msra.mxu0 0.0
    %995 = vmatprep.subr.mxu0 0.0
    %996 = vmatpush1.msra.mxu0 0.0
    %997 = vmatprep.subr.mxu0 0.0
    %998 = vmatpush1.msra.mxu0 0.0
    %999 = vmatprep.subr.mxu0 0.0
    %1000 = vmatpush1.msra.mxu0 0.0
    %1001 = vmatprep.subr.mxu0 0.0
    %1002 = vmatpush1.msra.mxu0 0.0
    %1003 = vmatprep.subr.mxu0 0.0
    %1004 = vmatpush1.msra.mxu0 0.0
    %1005 = vmatprep.subr.mxu0 0.0
    %1006 = vmatpush1.msra.mxu0 0.0
    %1007 = vmatprep.subr.mxu0 0.0
    %1008 = vmatpush1.msra.mxu0 0.0
    %1009 = vmatprep.subr.mxu0 0.0
    %1010 = vmatpush1.msra.mxu0 0.0
    %1011 = vmatprep.subr.mxu0 0.0
    %1012 = vmatpush1.msra.mxu0 0.0
    %1013 = vmatprep.subr.mxu0 0.0
    %1014 = vmatpush1.msra.mxu0 0.0
    %1015 = vmatprep.subr.mxu0 0.0
    %1016 = vmatpush1.msra.mxu0 0.0
    %1017 = vmatprep.subr.mxu0 0.0
    %1018 = vmatpush1.msra.mxu0 0.0
    %1019 = vmatprep.subr.mxu0 0.0
    %1020 = vmatpush1.msra.mxu0 0.0
    %1021 = vmatprep.subr.mxu0 0.0
    %1022 = vmatpush1.msra.mxu0 0.0
    %1023 = vmatprep.subr.mxu0 0.0
    %1024 = vmatpush1.msra.mxu0 0.0
    %1025 = vmatprep.mubr.f32.mxu0 0.0
    %1026 = vmatmul.mubr.f32.gmra.mrb[0].mxu0 %v959
    %v1027 = vpop.f32.mrb[0].mxu0
    %v1028 = vadd.f32 %v128, %v1027
    %v1029 = vpop.f32.mrb[0].mxu0
    %1030 = vdwg.mxu0
    %v1032 = vrot.slane %v1028, 2
    %v1033 = vrot.slane %v1028, 3
    %v1036 = vadd.f32 %v112, %v1032
    %v1037 = vadd.f32 %v117, %v1033
    %v1038 = vxor.u32 %v1036, 2147483648
    %v1039 = vxor.u32 %v1037, 2147483648
    %v1040 = vmul.f32 %v1038, 1.442695
    %v1041 = vpow.pop %v1040
    %v1042 = vmul.f32 %v1039, 1.442695
    %v1043 = vpow.pop %v1042
    %v1044 = vadd.f32 %v1041, 1.0
    %v1045 = vadd.f32 %v1043, 1.0
    %v1046 = vrcp.pop %v1044
    %v1047 = vmul.f32 1.0, %v1046
    %v1048 = vrcp.pop %v1045
    %v1049 = vmul.f32 1.0, %v1048
    %1050 = vrot.lane.b32.xlu0 %v1032, 64
    %v1051 = vpop.permute.xlu0 %1050
    %1052 = vrot.lane.b32.xlu0 %v1033, 64
    %v1053 = vpop.permute.xlu0 %1052
    %v1056 = vmul.f32 %v1047, %v1051
    %v1057 = vmul.f32 %v1049, %v1053
    %1060 = vrot.lane.b32.xlu0 %v1056, 64
    %v1061 = vpop.permute.xlu0 %1060
    %1062 = vrot.lane.b32.xlu0 %v1057, 64
    %v1063 = vpop.permute.xlu0 %1062
    %v1066 = vadd.f32 %v112, %v1061
    %v1067 = vadd.f32 %v117, %v1063
    %v1068 = vtanh.pop %v1066
    %v1069 = vtanh.pop %v1067
    %v1070 = vsub.f32 1.0, %v1047
    %v1071 = vsub.f32 1.0, %v1049
    %1074 = vrot.lane.b32.xlu0 %v1068, 96
    %v1075 = vpop.permute.xlu0 %1074
    %1076 = vrot.lane.b32.xlu0 %v1069, 96
    %v1077 = vpop.permute.xlu0 %1076
    %v1080 = vmul.f32 %v1070, %v1075
    %v1081 = vmul.f32 %v1071, %v1077
    %v1082 = vrot.slane %v950, 7
    %v1083 = vrot.slane %v951, 7
    %v1086 = vmul.f32 %v1047, %v1082
    %v1087 = vmul.f32 %v1049, %v1083
    %v1088 = vadd.f32 %v1080, %v1086
    %v1089 = vadd.f32 %v1081, %v1087
    %v1092 = vrot.slane %v1088, 6
    %v1093 = vrot.slane %v1089, 5
    %v1094 = vsel %vm268, %v1093, %v1092
    %1095 = vrot.lane.b32.xlu0 %v1094, 96
    %v1096 = vpop.permute.xlu0 %1095
    %v1097 = vsel %vm130, %v1096, 0
    %1099 = vmatprep.subr.mxu0 0.0
    %1100 = vmatpush1.msra.mxu0 %v120
    %1101 = vmatprep.subr.mxu0 0.0
    %1102 = vmatpush1.msra.mxu0 %v121
    %1103 = vmatprep.subr.mxu0 0.0
    %1104 = vmatpush1.msra.mxu0 %v122
    %1105 = vmatprep.subr.mxu0 0.0
    %1106 = vmatpush1.msra.mxu0 %v123
    %1107 = vmatprep.subr.mxu0 0.0
    %1108 = vmatpush1.msra.mxu0 0.0
    %1109 = vmatprep.subr.mxu0 0.0
    %1110 = vmatpush1.msra.mxu0 0.0
    %1111 = vmatprep.subr.mxu0 0.0
    %1112 = vmatpush1.msra.mxu0 0.0
    %1113 = vmatprep.subr.mxu0 0.0
    %1114 = vmatpush1.msra.mxu0 0.0
    %1115 = vmatprep.subr.mxu0 0.0
    %1116 = vmatpush1.msra.mxu0 0.0
    %1117 = vmatprep.subr.mxu0 0.0
    %1118 = vmatpush1.msra.mxu0 0.0
    %1119 = vmatprep.subr.mxu0 0.0
    %1120 = vmatpush1.msra.mxu0 0.0
    %1121 = vmatprep.subr.mxu0 0.0
    %1122 = vmatpush1.msra.mxu0 0.0
    %1123 = vmatprep.subr.mxu0 0.0
    %1124 = vmatpush1.msra.mxu0 0.0
    %1125 = vmatprep.subr.mxu0 0.0
    %1126 = vmatpush1.msra.mxu0 0.0
    %1127 = vmatprep.subr.mxu0 0.0
    %1128 = vmatpush1.msra.mxu0 0.0
    %1129 = vmatprep.subr.mxu0 0.0
    %1130 = vmatpush1.msra.mxu0 0.0
    %1131 = vmatprep.subr.mxu0 0.0
    %1132 = vmatpush1.msra.mxu0 0.0
    %1133 = vmatprep.subr.mxu0 0.0
    %1134 = vmatpush1.msra.mxu0 0.0
    %1135 = vmatprep.subr.mxu0 0.0
    %1136 = vmatpush1.msra.mxu0 0.0
    %1137 = vmatprep.subr.mxu0 0.0
    %1138 = vmatpush1.msra.mxu0 0.0
    %1139 = vmatprep.subr.mxu0 0.0
    %1140 = vmatpush1.msra.mxu0 0.0
    %1141 = vmatprep.subr.mxu0 0.0
    %1142 = vmatpush1.msra.mxu0 0.0
    %1143 = vmatprep.subr.mxu0 0.0
    %1144 = vmatpush1.msra.mxu0 0.0
    %1145 = vmatprep.subr.mxu0 0.0
    %1146 = vmatpush1.msra.mxu0 0.0
    %1147 = vmatprep.subr.mxu0 0.0
    %1148 = vmatpush1.msra.mxu0 0.0
    %1149 = vmatprep.subr.mxu0 0.0
    %1150 = vmatpush1.msra.mxu0 0.0
    %1151 = vmatprep.subr.mxu0 0.0
    %1152 = vmatpush1.msra.mxu0 0.0
    %1153 = vmatprep.subr.mxu0 0.0
    %1154 = vmatpush1.msra.mxu0 0.0
    %1155 = vmatprep.subr.mxu0 0.0
    %1156 = vmatpush1.msra.mxu0 0.0
    %1157 = vmatprep.subr.mxu0 0.0
    %1158 = vmatpush1.msra.mxu0 0.0
    %1159 = vmatprep.subr.mxu0 0.0
    %1160 = vmatpush1.msra.mxu0 0.0
    %1161 = vmatprep.subr.mxu0 0.0
    %1162 = vmatpush1.msra.mxu0 0.0
    %1163 = vmatprep.mubr.f32.mxu0 0.0
    %1164 = vmatmul.mubr.f32.gmra.mrb[0].mxu0 %v1097
    %v1165 = vpop.f32.mrb[0].mxu0
    %v1166 = vadd.f32 %v128, %v1165
    %v1167 = vpop.f32.mrb[0].mxu0
    %1168 = vdwg.mxu0
    %v1170 = vrot.slane %v1166, 1
    %v1171 = vrot.slane %v1166, 2
    %v1174 = vadd.f32 %v112, %v1170
    %v1175 = vadd.f32 %v117, %v1171
    %v1176 = vxor.u32 %v1174, 2147483648
    %v1177 = vxor.u32 %v1175, 2147483648
    %v1178 = vmul.f32 %v1176, 1.442695
    %v1179 = vpow.pop %v1178
    %v1180 = vmul.f32 %v1177, 1.442695
    %v1181 = vpow.pop %v1180
    %v1182 = vadd.f32 %v1179, 1.0
    %v1183 = vadd.f32 %v1181, 1.0
    %v1184 = vrcp.pop %v1182
    %v1185 = vmul.f32 1.0, %v1184
    %v1186 = vrcp.pop %v1183
    %v1187 = vmul.f32 1.0, %v1186
    %1188 = vrot.lane.b32.xlu0 %v1170, 64
    %v1189 = vpop.permute.xlu0 %1188
    %1190 = vrot.lane.b32.xlu0 %v1171, 64
    %v1191 = vpop.permute.xlu0 %1190
    %v1194 = vmul.f32 %v1185, %v1189
    %v1195 = vmul.f32 %v1187, %v1191
    %1198 = vrot.lane.b32.xlu0 %v1194, 64
    %v1199 = vpop.permute.xlu0 %1198
    %1200 = vrot.lane.b32.xlu0 %v1195, 64
    %v1201 = vpop.permute.xlu0 %1200
    %v1204 = vadd.f32 %v112, %v1199
    %v1205 = vadd.f32 %v117, %v1201
    %v1206 = vtanh.pop %v1204
    %v1207 = vtanh.pop %v1205
    %v1208 = vsub.f32 1.0, %v1185
    %v1209 = vsub.f32 1.0, %v1187
    %1212 = vrot.lane.b32.xlu0 %v1206, 96
    %v1213 = vpop.permute.xlu0 %1212
    %1214 = vrot.lane.b32.xlu0 %v1207, 96
    %v1215 = vpop.permute.xlu0 %1214
    %v1218 = vmul.f32 %v1208, %v1213
    %v1219 = vmul.f32 %v1209, %v1215
    %v1220 = vrot.slane %v1088, 7
    %v1221 = vrot.slane %v1089, 7
    %v1224 = vmul.f32 %v1185, %v1220
    %v1225 = vmul.f32 %v1187, %v1221
    %v1226 = vadd.f32 %v1218, %v1224
    %v1227 = vadd.f32 %v1219, %v1225
    %v1230 = vrot.slane %v1227, 7
    %1231 = vrot.lane.b32.xlu0 %v1226, 96
    %v1232 = vpop.permute.xlu0 %1231
    %1233 = vrot.lane.b32.xlu0 %v1230, 96
    %v1234 = vpop.permute.xlu0 %1233
    %vm1237 = vcmask 261127
    %1238 = vst.msk [vmem:[#allocation2 - $0x7] sm:$0x80] %vm1237, %v1232
    %vm1239 = vcmask 253952
    %1240 = vst.msk [vmem:[#allocation2 + $0x1] sm:$0x1] %vm1239, %v1234
    %v1241 = vrot.slane %v400, 1
    %v1242 = vrot.slane %v537, 2
    %v1243 = vrot.slane %v675, 3
    %v1244 = vrot.slane %v813, 4
    %v1245 = vrot.slane %v951, 5
    %v1246 = vrot.slane %v1089, 6
    %v1247 = vrot.slane %v1226, 7
    %v1248 = vld [vmem:[%s5] sm:$0xff]
    %v1249 = vld [vmem:[%s5 + $0x8] sm:$0xff]
    %v1250 = vld [vmem:[%s5 + $0x10] sm:$0xff]
    %v1251 = vld [vmem:[%s5 + $0x18] sm:$0xff]
    %v1252 = vld [vmem:[%s4 + $0x2] sm:$0x1]
    %v1253 = vlaneseq
    %v1254 = vshrl.u32 %v1253, 7
    %v1255 = vsub.s32 0, %v1254
    %v1256 = vrot.slane %v1252, %v1255
    %v1257 = vrot.slane %v403, 6
    %vm1258 = vcmask 1042434
    %v1259 = vsel %vm1258, %v1257, %v269
    %v1260 = vrot.slane %v1241, 5
    %vm1261 = vcmask 1043459
    %v1262 = vsel %vm1261, %v1260, %v1259
    %v1263 = vrot.slane %v540, 4
    %vm1264 = vcmask 1044484
    %v1265 = vsel %vm1264, %v1263, %v1262
    %v1266 = vrot.slane %v1242, 3
    %vm1267 = vcmask 1045509
    %v1268 = vsel %vm1267, %v1266, %v1265
    %v1269 = vrot.slane %v678, 2
    %vm1270 = vcmask 1046534
    %v1271 = vsel %vm1270, %v1269, %v1268
    %v1272 = vrot.slane %v1243, 1
    %vm1273 = vcmask 1047559
    %v1274 = vsel %vm1273, %v1272, %v1271
    %v1275 = vrot.slane %v1244, 7
    %v1276 = vsel %vm268, %v1275, %v816
    %v1277 = vrot.slane %v954, 6
    %v1278 = vsel %vm1258, %v1277, %v1276
    %v1279 = vrot.slane %v1245, 5
    %v1280 = vsel %vm1261, %v1279, %v1278
    %v1281 = vrot.slane %v1092, 4
    %v1282 = vsel %vm1264, %v1281, %v1280
    %v1283 = vrot.slane %v1246, 3
    %v1284 = vsel %vm1267, %v1283, %v1282
    %v1285 = vrot.slane %v1247, 2
    %v1286 = vsel %vm1270, %v1285, %v1284
    %v1287 = vrot.slane %v1230, 1
    %v1288 = vsel %vm1273, %v1287, %v1286
    %1289 = vrot.lane.b32.xlu0 %v1274, 96
    %v1290 = vpop.permute.xlu0 %1289
    %1291 = vrot.lane.b32.xlu0 %v1288, 96
    %v1292 = vpop.permute.xlu0 %1291
    %v1293 = vsel %vm130, %v1290, 0
    %v1295 = vsel %vm130, %v1292, 0
    %1297 = vmatprep.subr.mxu0 0.0
    %1298 = vmatpush1.msra.mxu0 %v1248
    %1299 = vmatprep.subr.mxu0 0.0
    %1300 = vmatpush1.msra.mxu0 %v1249
    %1301 = vmatprep.subr.mxu0 0.0
    %1302 = vmatpush1.msra.mxu0 %v1250
    %1303 = vmatprep.subr.mxu0 0.0
    %1304 = vmatpush1.msra.mxu0 %v1251
    %1305 = vmatprep.subr.mxu0 0.0
    %1306 = vmatpush1.msra.mxu0 0.0
    %1307 = vmatprep.subr.mxu0 0.0
    %1308 = vmatpush1.msra.mxu0 0.0
    %1309 = vmatprep.subr.mxu0 0.0
    %1310 = vmatpush1.msra.mxu0 0.0
    %1311 = vmatprep.subr.mxu0 0.0
    %1312 = vmatpush1.msra.mxu0 0.0
    %1313 = vmatprep.subr.mxu0 0.0
    %1314 = vmatpush1.msra.mxu0 0.0
    %1315 = vmatprep.subr.mxu0 0.0
    %1316 = vmatpush1.msra.mxu0 0.0
    %1317 = vmatprep.subr.mxu0 0.0
    %1318 = vmatpush1.msra.mxu0 0.0
    %1319 = vmatprep.subr.mxu0 0.0
    %1320 = vmatpush1.msra.mxu0 0.0
    %1321 = vmatprep.subr.mxu0 0.0
    %1322 = vmatpush1.msra.mxu0 0.0
    %1323 = vmatprep.subr.mxu0 0.0
    %1324 = vmatpush1.msra.mxu0 0.0
    %1325 = vmatprep.subr.mxu0 0.0
    %1326 = vmatpush1.msra.mxu0 0.0
    %1327 = vmatprep.subr.mxu0 0.0
    %1328 = vmatpush1.msra.mxu0 0.0
    %1329 = vmatprep.subr.mxu0 0.0
    %1330 = vmatpush1.msra.mxu0 0.0
    %1331 = vmatprep.subr.mxu0 0.0
    %1332 = vmatpush1.msra.mxu0 0.0
    %1333 = vmatprep.subr.mxu0 0.0
    %1334 = vmatpush1.msra.mxu0 0.0
    %1335 = vmatprep.subr.mxu0 0.0
    %1336 = vmatpush1.msra.mxu0 0.0
    %1337 = vmatprep.subr.mxu0 0.0
    %1338 = vmatpush1.msra.mxu0 0.0
    %1339 = vmatprep.subr.mxu0 0.0
    %1340 = vmatpush1.msra.mxu0 0.0
    %1341 = vmatprep.subr.mxu0 0.0
    %1342 = vmatpush1.msra.mxu0 0.0
    %1343 = vmatprep.subr.mxu0 0.0
    %1344 = vmatpush1.msra.mxu0 0.0
    %1345 = vmatprep.subr.mxu0 0.0
    %1346 = vmatpush1.msra.mxu0 0.0
    %1347 = vmatprep.subr.mxu0 0.0
    %1348 = vmatpush1.msra.mxu0 0.0
    %1349 = vmatprep.subr.mxu0 0.0
    %1350 = vmatpush1.msra.mxu0 0.0
    %1351 = vmatprep.subr.mxu0 0.0
    %1352 = vmatpush1.msra.mxu0 0.0
    %1353 = vmatprep.subr.mxu0 0.0
    %1354 = vmatpush1.msra.mxu0 0.0
    %1355 = vmatprep.subr.mxu0 0.0
    %1356 = vmatpush1.msra.mxu0 0.0
    %1357 = vmatprep.subr.mxu0 0.0
    %1358 = vmatpush1.msra.mxu0 0.0
    %1359 = vmatprep.subr.mxu0 0.0
    %1360 = vmatpush1.msra.mxu0 0.0
    %1361 = vmatprep.mubr.f32.mxu0 0.0
    %1362 = vmatmul.mubr.f32.gmra.mrb[0].mxu0 %v1293
    %v1363 = vpop.f32.mrb[0].mxu0
    %v1364 = vadd.f32 %v1256, %v1363
    %v1365 = vpop.f32.mrb[0].mxu0
    %1366 = vmatprep.mubr.f32.mxu0 0.0
    %1367 = vmatmul.mubr.f32.gmra.mrb[0].mxu0 %v1295
    %v1368 = vpop.f32.mrb[0].mxu0
    %v1369 = vadd.f32 %v1256, %v1368
    %v1370 = vpop.f32.mrb[0].mxu0
    %1371 = vdwg.mxu0
    %v1374 = vcombine.high %v1364, %v1364
    %v1376 = vunpack.c.l.s4 1983009808
    %v1377 = vunpack.c.0.s8 %v1376
    %v1378 = vlaneseq
    %v1379 = vshrl.u32 %v1378, 7
    %v1380 = vsub.s32 %v1377, %v1379
    %v1381 = vrot.slane %v1364, %v1380
    %v1383 = vunpack.c.l.s4 1983009808
    %v1384 = vunpack.c.0.s8 %v1383
    %v1385 = vlaneseq
    %v1386 = vshrl.u32 %v1385, 7
    %v1387 = vsub.s32 %v1384, %v1386
    %v1388 = vrot.slane %v1374, %v1387
    %v1389 = vcombine.high %v1381, %v1381
    %v1390 = vcombine.high %v1388, %v1388
    %v1391 = vcombine.high %v1369, %v1369
    %v1393 = vunpack.c.l.s4 1983009808
    %v1394 = vunpack.c.0.s8 %v1393
    %v1395 = vlaneseq
    %v1396 = vshrl.u32 %v1395, 7
    %v1397 = vsub.s32 %v1394, %v1396
    %v1398 = vrot.slane %v1369, %v1397
    %v1400 = vunpack.c.l.s4 1983009808
    %v1401 = vunpack.c.0.s8 %v1400
    %v1402 = vlaneseq
    %v1403 = vshrl.u32 %v1402, 7
    %v1404 = vsub.s32 %v1401, %v1403
    %v1405 = vrot.slane %v1391, %v1404
    %v1406 = vcombine.high %v1398, %v1398
    %v1407 = vcombine.high %v1405, %v1405
    %v1408 = vlaneseq
    %v1409 = vshrl.u32 %v1408, 7
    %v1410 = vsub.s32 0, %v1409
    %v1411 = vrot.slane %v1381, %v1410
    %v1412 = vlaneseq
    %v1413 = vshrl.u32 %v1412, 7
    %v1414 = vsub.s32 0, %v1413
    %v1415 = vrot.slane %v1389, %v1414
    %v1416 = vlaneseq
    %v1417 = vshrl.u32 %v1416, 7
    %v1418 = vsub.s32 0, %v1417
    %v1419 = vrot.slane %v1388, %v1418
    %v1420 = vlaneseq
    %v1421 = vshrl.u32 %v1420, 7
    %v1422 = vsub.s32 0, %v1421
    %v1423 = vrot.slane %v1390, %v1422
    %v1424 = vlaneseq
    %v1425 = vshrl.u32 %v1424, 7
    %v1426 = vsub.s32 0, %v1425
    %v1427 = vrot.slane %v1398, %v1426
    %v1428 = vlaneseq
    %v1429 = vshrl.u32 %v1428, 7
    %v1430 = vsub.s32 0, %v1429
    %v1431 = vrot.slane %v1406, %v1430
    %v1432 = vlaneseq
    %v1433 = vshrl.u32 %v1432, 7
    %v1434 = vsub.s32 0, %v1433
    %v1435 = vrot.slane %v1405, %v1434
    %v1436 = vlaneseq
    %v1437 = vshrl.u32 %v1436, 7
    %v1438 = vsub.s32 0, %v1437
    %v1439 = vrot.slane %v1407, %v1438
    %v1440 = vsel %vm268, %v1415, %v1411
    %v1441 = vsel %vm1258, %v1419, %v1440
    %v1442 = vsel %vm1261, %v1423, %v1441
    %v1443 = vsel %vm1264, %v1427, %v1442
    %v1444 = vsel %vm1267, %v1431, %v1443
    %v1445 = vsel %vm1270, %v1435, %v1444
    %v1446 = vsel %vm1273, %v1439, %v1445
    %1448 = vst.msk [vmem:[%s6] sm:$0xff] %vm34, %v1446
    %v1449 = vlaneseq
    %v1450 = vshrl.u32 %v1449, 7
    %v1451 = vsub.s32 1, %v1450
    %v1452 = vrot.slane %v1381, %v1451
    %v1453 = vlaneseq
    %v1454 = vshrl.u32 %v1453, 7
    %v1455 = vsub.s32 1, %v1454
    %v1456 = vrot.slane %v1389, %v1455
    %v1457 = vlaneseq
    %v1458 = vshrl.u32 %v1457, 7
    %v1459 = vsub.s32 1, %v1458
    %v1460 = vrot.slane %v1388, %v1459
    %v1461 = vlaneseq
    %v1462 = vshrl.u32 %v1461, 7
    %v1463 = vsub.s32 1, %v1462
    %v1464 = vrot.slane %v1390, %v1463
    %v1465 = vlaneseq
    %v1466 = vshrl.u32 %v1465, 7
    %v1467 = vsub.s32 1, %v1466
    %v1468 = vrot.slane %v1398, %v1467
    %v1469 = vlaneseq
    %v1470 = vshrl.u32 %v1469, 7
    %v1471 = vsub.s32 1, %v1470
    %v1472 = vrot.slane %v1406, %v1471
    %v1473 = vlaneseq
    %v1474 = vshrl.u32 %v1473, 7
    %v1475 = vsub.s32 1, %v1474
    %v1476 = vrot.slane %v1405, %v1475
    %v1477 = vlaneseq
    %v1478 = vshrl.u32 %v1477, 7
    %v1479 = vsub.s32 1, %v1478
    %v1480 = vrot.slane %v1407, %v1479
    %v1481 = vsel %vm1258, %v1456, %v1452
    %v1482 = vsel %vm1261, %v1460, %v1481
    %v1483 = vsel %vm1264, %v1464, %v1482
    %v1484 = vsel %vm1267, %v1468, %v1483
    %v1485 = vsel %vm1270, %v1472, %v1484
    %v1486 = vsel %vm1273, %v1476, %v1485
    %s1489 = scalar_lea.vmem %s6, 8
    %vm1490 = vcmask 31745
    %1491 = vst.msk [vmem:[%s1489 - $0x1] sm:$0xfe] %vm1490, %v1486
    %vm1492 = vcmask 24576
    %1493 = vst.msk [vmem:[%s1489 + $0x7] sm:$0x1] %vm1492, %v1480
    // Predicated region
    $region26: #{rnn_model_forward.1} parent=1 // pred_check
      _
    $region27: #{rnn_model_forward.1} parent=1 // pred_check_branch
      %1495 = sbr.rel (0) target = $region29
    $region28: #{rnn_model_forward.1} parent=1 // pred_region
      _
    $region29: #{rnn_model_forward.1} parent=1 // pred_fallthru
      _
    // Predicated region
    $region30: #{rnn_model_forward.1} parent=1 // pred_check
      _
    $region31: #{rnn_model_forward.1} parent=1 // pred_check_branch
      %1497 = sbr.rel (0) target = $region33
    $region32: #{rnn_model_forward.1} parent=1 // pred_region
      %s1499 = ssub.s32 32, 32
      %1500 = vsyncadd [#allocation3], %s1499
      %s1502 = sshll.u32 [#allocation2], 4
      %s1503 = int_to_ptr.vmem [resolvable:$true] %s1502
      %1505 = dma.vmem_to_hbm [thread:$0]  %s1503, 32, %s7, [#allocation3]
    $region33: #{rnn_model_forward.1} parent=1 // pred_fallthru
      _
    // Predicated region
    $region34: #{rnn_model_forward.1} parent=1 // pred_check
      _
    $region35: #{rnn_model_forward.1} parent=1 // pred_check_branch
      %1507 = sbr.rel (0) target = $region37
    $region36: #{rnn_model_forward.1} parent=1 // pred_region
      _
    $region37: #{rnn_model_forward.1} parent=1 // pred_fallthru
      _
    // Predicated region
    $region38: #{rnn_model_forward.1} parent=1 // pred_check
      _
    $region39: #{rnn_model_forward.1} parent=1 // pred_check_branch
      %1509 = sbr.rel (0) target = $region41
    $region40: #{rnn_model_forward.1} parent=1 // pred_region
      %1510 = dma.done [#allocation3], 32
    $region41: #{rnn_model_forward.1} parent=1 // pred_fallthru
      _
    %1511 = vsyncpa [#allocation3], 1

</llo_original>
